<compile_context>
chip_gen: v7x
topology: tpu7x:2x2x1
jax: 0.10.0
libtpu: 0.0.40
codegen_flags: <defaults>
</compile_context>

<pallas_src>
import functools
import math

import jax
import jax.numpy as jnp
from jax.experimental import pallas as pl
from jax.experimental.pallas import tpu as pltpu


def _attention_layer_kernel(
    x_q_ref, x_kv_ref,                                   # inputs (x twice: Q view / KV view)
    wq_ref, bq_ref, wk_ref, bk_ref, wv_ref, bv_ref,      # projection weights
    wo_ref, bo_ref,                                      # output projection (per-head) weights
    o_ref,                                               # output
    q_sc, k_sc, v_sc, m_sc, l_sc, acc_sc,                # VMEM scratch
    *, n_heads, d_keys, d_values, scale, compute_dtype, approx_recip):
  kv = pl.program_id(2)
  nkv = pl.num_programs(2)
  cd = compute_dtype

  # ---- init accumulators + Q projection once per (batch, q-tile) ----
  @pl.when(kv == 0)
  def _init():
    m_sc[...] = jnp.full_like(m_sc, -jnp.inf)
    l_sc[...] = jnp.zeros_like(l_sc)
    acc_sc[...] = jnp.zeros_like(acc_sc)
    xq = x_q_ref[...]                                    # (TQ, D)
    q = jnp.dot(xq.astype(cd), wq_ref[...].astype(cd),
                preferred_element_type=jnp.float32) + bq_ref[0]
    q = q * scale                                        # fold softmax scale into Q once
    for h in range(n_heads):                             # head-major cache (H, TQ, d_k)
      q_sc[h] = q[:, h * d_keys:(h + 1) * d_keys]

  # ---- K/V projection for this KV tile (wide MXU matmuls) ----
  # TODO(synk): for very large L, K/V projections are recomputed per q-tile;
  # a separate projection pass (or caching K/V in HBM) would remove that.
  xkv = x_kv_ref[...]                                    # (TK, D)
  k = jnp.dot(xkv.astype(cd), wk_ref[...].astype(cd),
              preferred_element_type=jnp.float32) + bk_ref[0]
  v = jnp.dot(xkv.astype(cd), wv_ref[...].astype(cd),
              preferred_element_type=jnp.float32) + bv_ref[0]
  for h in range(n_heads):                               # head-major (H, TK, d)
    k_sc[h] = k[:, h * d_keys:(h + 1) * d_keys]
    v_sc[h] = v[:, h * d_values:(h + 1) * d_values]

  # ---- head-batched scores + online softmax ----
  s = jnp.einsum('hqd,hkd->hqk',
                 q_sc[...].astype(cd), k_sc[...].astype(cd),
                 preferred_element_type=jnp.float32)     # (H, TQ, TK), scale already in q
  m_prev = m_sc[...]
  m_new = jnp.maximum(m_prev, jnp.max(s, axis=-1, keepdims=True))
  alpha = jnp.exp(m_prev - m_new)
  p = jnp.exp(s - m_new)
  l_sc[...] = alpha * l_sc[...] + jnp.sum(p, axis=-1, keepdims=True)
  pv = jnp.einsum('hqk,hkv->hqv',
                  p.astype(cd), v_sc[...].astype(cd),
                  preferred_element_type=jnp.float32)    # (H, TQ, d_v)
  acc_sc[...] = alpha * acc_sc[...] + pv
  m_sc[...] = m_new

  # ---- finalize: normalize + per-head folded output projection ----
  @pl.when(kv == nkv - 1)
  def _finalize():
    inv_l = pl.reciprocal(l_sc[...], approx=approx_recip)
    acc_n = acc_sc[...] * inv_l                          # (H, TQ, d_v)
    out_h = jnp.einsum('hqv,hvd->hqd',
                       acc_n.astype(cd), wo_ref[...].astype(cd),
                       preferred_element_type=jnp.float32)   # (H, TQ, D)
    out = out_h[0]
    for h in range(1, n_heads):                          # cheap vreg adds over heads
      out = out + out_h[h]
    out = out + bo_ref[0]
    o_ref[...] = out.astype(o_ref.dtype)


def attention_layer_pallas(x, params, *, n_heads, d_keys, d_values, scale=None,
                           block_q=None, block_kv=None, compute_dtype=None,
                           vmem_limit_bytes=64 * 1024 * 1024):
  """x: (N, L, d_model). params: pre-transposed Linear weights/biases.

  compute_dtype: dtype of MXU operands (e.g. jnp.bfloat16 on v6e/v7x);
  accumulation and softmax statistics stay in float32.
  vmem_limit_bytes: re-derive per generation (v5e scoped default 16 MiB,
  v7x physical 64 MiB) and leave headroom.
  """
  N, L, D = x.shape
  hk = n_heads * d_keys
  hv = n_heads * d_values
  if scale is None:
    scale = 1.0 / math.sqrt(d_keys)
  tq = min(block_q or 128, L)
  tk = min(block_kv or 128, L)
  if L % tq != 0 or L % tk != 0:
    raise ValueError("L must be divisible by block_q and block_kv")
  cd = jnp.dtype(compute_dtype) if compute_dtype is not None else jnp.dtype(x.dtype)
  approx_recip = (cd != jnp.dtype(jnp.float32))

  # Pre-reshape Wo to (H, d_v, D) so the kernel folds the output projection
  # per head without a lane-dim concat.
  wo_h = params["wo"].reshape(n_heads, d_values, D)

  kernel = functools.partial(
      _attention_layer_kernel,
      n_heads=n_heads, d_keys=d_keys, d_values=d_values, scale=scale,
      compute_dtype=cd, approx_recip=approx_recip)

  # NOTE: weight/bias specs have constant index maps (fetched once per call);
  # for very large d_model they could additionally be single-buffered via
  # pipeline_mode=pl.Buffered(1) to save VMEM.
  const2d = lambda shape: pl.BlockSpec(shape, lambda n, qi, kv: (0, 0))
  const3d = lambda shape: pl.BlockSpec(shape, lambda n, qi, kv: (0, 0, 0))

  grid = (N, L // tq, L // tk)

  return pl.pallas_call(
      kernel,
      out_shape=jax.ShapeDtypeStruct((N, L, D), x.dtype),
      grid=grid,
      in_specs=[
          pl.BlockSpec((None, tq, D), lambda n, qi, kv: (n, qi, 0)),  # x, query tile
          pl.BlockSpec((None, tk, D), lambda n, qi, kv: (n, kv, 0)),  # x, key/value tile
          const2d((D, hk)), const2d((1, hk)),                         # W_Q^T, b_Q
          const2d((D, hk)), const2d((1, hk)),                         # W_K^T, b_K
          const2d((D, hv)), const2d((1, hv)),                         # W_V^T, b_V
          const3d((n_heads, d_values, D)),                            # W_out^T per head
          const2d((1, D)),                                            # b_out
      ],
      out_specs=pl.BlockSpec((None, tq, D), lambda n, qi, kv: (n, qi, 0)),
      scratch_shapes=[
          pltpu.VMEM((n_heads, tq, d_keys), jnp.float32),    # scaled Q (cached per q-tile)
          pltpu.VMEM((n_heads, tk, d_keys), jnp.float32),    # K (head-major)
          pltpu.VMEM((n_heads, tk, d_values), jnp.float32),  # V (head-major)
          pltpu.VMEM((n_heads, tq, 1), jnp.float32),         # running max m
          pltpu.VMEM((n_heads, tq, 1), jnp.float32),         # running sum l
          pltpu.VMEM((n_heads, tq, d_values), jnp.float32),  # output accumulator
      ],
      compiler_params=pltpu.CompilerParams(
          dimension_semantics=("parallel", "parallel", "arbitrary"),
          vmem_limit_bytes=vmem_limit_bytes),
  )(x, x,
    params["wq"], params["bq"], params["wk"], params["bk"],
    params["wv"], params["bv"], wo_h, params["bo"])


def _init_params(key, d_model, n_heads, d_keys, d_values):
  """PyTorch-Linear-style init; weights stored pre-transposed (in, out)."""
  hk = n_heads * d_keys
  hv = n_heads * d_values
  ks = jax.random.split(key, 8)

  def lin(kw, kb, fan_in, fan_out):
    bound = 1.0 / math.sqrt(fan_in)
    w = jax.random.uniform(kw, (fan_in, fan_out), jnp.float32, -bound, bound)
    b = jax.random.uniform(kb, (1, fan_out), jnp.float32, -bound, bound)
    return w, b

  wq, bq = lin(ks[0], ks[1], d_model, hk)
  wk, bk = lin(ks[2], ks[3], d_model, hk)
  wv, bv = lin(ks[4], ks[5], d_model, hv)
  wo, bo = lin(ks[6], ks[7], hv, d_model)
  return dict(wq=wq, bq=bq, wk=wk, bk=bk, wv=wv, bv=bv, wo=wo, bo=bo)


def _reference_jax(x, params, *, n_heads, d_keys, d_values, scale=None):
  """Pure-JAX reference mirroring the PyTorch forward."""
  N, L, D = x.shape
  if scale is None:
    scale = 1.0 / math.sqrt(d_keys)
  q = (x @ params["wq"] + params["bq"][0]).reshape(N, L, n_heads, d_keys)
  k = (x @ params["wk"] + params["bk"][0]).reshape(N, L, n_heads, d_keys)
  v = (x @ params["wv"] + params["bv"][0]).reshape(N, L, n_heads, d_values)
  s = jnp.einsum("nlhd,nshd->nhls", q, k) * scale
  p = jax.nn.softmax(s, axis=-1)
  o = jnp.einsum("nhls,nshd->nlhd", p, v).reshape(N, L, n_heads * d_values)
  return o @ params["wo"] + params["bo"][0]


if __name__ == "__main__":
  # Small shapes consistent with the module: input N x L x d_model.
  N, L, d_model, n_heads = 2, 16, 32, 4
  d_keys = d_model // n_heads
  d_values = d_model // n_heads
  window_size = L  # kept for API parity; unused by the forward pass

  key = jax.random.PRNGKey(0)
  kx, kp = jax.random.split(key)
  x = jax.random.normal(kx, (N, L, d_model), jnp.float32)
  params = _init_params(kp, d_model, n_heads, d_keys, d_values)

  # f32 path; block_q = block_kv = 8 so the online-softmax accumulation over
  # multiple KV tiles is actually exercised (grid = (2, 2, 2)).
  out = attention_layer_pallas(
      x, params, n_heads=n_heads, d_keys=d_keys, d_values=d_values,
      block_q=8, block_kv=8)
  out = jax.block_until_ready(out)

  ref = _reference_jax(
      x, params, n_heads=n_heads, d_keys=d_keys, d_values=d_values)
  assert out.shape == (N, L, d_model)
  assert jnp.allclose(out, ref, atol=1e-4, rtol=1e-4), "f32 mismatch vs JAX reference"

  # bf16 MXU-operand fast path (f32 accumulation / softmax stats), looser check.
  out_bf16 = attention_layer_pallas(
      x, params, n_heads=n_heads, d_keys=d_keys, d_values=d_values,
      block_q=8, block_kv=8, compute_dtype=jnp.bfloat16)
  out_bf16 = jax.block_until_ready(out_bf16)
  assert jnp.allclose(out_bf16, ref, atol=5e-2, rtol=5e-2), "bf16 mismatch vs JAX reference"

  print("KERNEL_OK")
</pallas_src>

<mosaic_0001>
module attributes {stable_mosaic.version = 11 : i64} {
  func.func @_attention_layer_kernel(%arg0: i32, %arg1: i32, %arg2: i32, %arg3: memref<1x8x32xf32, #tpu.memory_space<vmem>>, %arg4: memref<1x8x32xf32, #tpu.memory_space<vmem>>, %arg5: memref<32x32xf32, #tpu.memory_space<vmem>>, %arg6: memref<1x32xf32, #tpu.memory_space<vmem>>, %arg7: memref<32x32xf32, #tpu.memory_space<vmem>>, %arg8: memref<1x32xf32, #tpu.memory_space<vmem>>, %arg9: memref<32x32xf32, #tpu.memory_space<vmem>>, %arg10: memref<1x32xf32, #tpu.memory_space<vmem>>, %arg11: memref<4x8x32xf32, #tpu.memory_space<vmem>>, %arg12: memref<1x32xf32, #tpu.memory_space<vmem>>, %arg13: memref<1x8x32xf32, #tpu.memory_space<vmem>>, %arg14: memref<4x8x8xf32, #tpu.memory_space<vmem>>, %arg15: memref<4x8x8xf32, #tpu.memory_space<vmem>>, %arg16: memref<4x8x8xf32, #tpu.memory_space<vmem>>, %arg17: memref<4x8x1xf32, #tpu.memory_space<vmem>>, %arg18: memref<4x8x1xf32, #tpu.memory_space<vmem>>, %arg19: memref<4x8x8xf32, #tpu.memory_space<vmem>>) attributes {dimension_semantics = [#tpu.dimension_semantics<parallel>, #tpu.dimension_semantics<parallel>, #tpu.dimension_semantics<arbitrary>], iteration_bounds = array<i64: 2, 2, 2>, scalar_prefetch = 0 : i64, scratch_operands = 6 : i64, tpu.core_type = #tpu.core_type<tc>, window_params = [{transform_indices = @transform_0, window_bounds = array<i64: 1, 8, 32>}, {transform_indices = @transform_1, window_bounds = array<i64: 1, 8, 32>}, {pipeline_mode = #tpu.pipeline_mode<synchronous>, transform_indices = @transform_2, window_bounds = array<i64: 32, 32>}, {pipeline_mode = #tpu.pipeline_mode<synchronous>, transform_indices = @transform_3, window_bounds = array<i64: 1, 32>}, {pipeline_mode = #tpu.pipeline_mode<synchronous>, transform_indices = @transform_4, window_bounds = array<i64: 32, 32>}, {pipeline_mode = #tpu.pipeline_mode<synchronous>, transform_indices = @transform_5, window_bounds = array<i64: 1, 32>}, {pipeline_mode = #tpu.pipeline_mode<synchronous>, transform_indices = @transform_6, window_bounds = array<i64: 32, 32>}, {pipeline_mode = #tpu.pipeline_mode<synchronous>, transform_indices = @transform_7, window_bounds = array<i64: 1, 32>}, {pipeline_mode = #tpu.pipeline_mode<synchronous>, transform_indices = @transform_8, window_bounds = array<i64: 4, 8, 32>}, {pipeline_mode = #tpu.pipeline_mode<synchronous>, transform_indices = @transform_9, window_bounds = array<i64: 1, 32>}, {transform_indices = @transform_10, window_bounds = array<i64: 1, 8, 32>}]} {
    %c0_i32 = arith.constant 0 : i32
    %0 = arith.cmpi eq, %arg2, %c0_i32 : i32
    %1 = arith.extui %0 : i1 to i32
    %c0_i32_0 = arith.constant 0 : i32
    %2 = arith.cmpi ne, %1, %c0_i32_0 : i32
    scf.if %2 {
      %cst_65 = arith.constant 0xFF800000 : f32
      %80 = vector.broadcast %cst_65 : f32 to vector<4x8x1xf32>
      %c0_66 = arith.constant 0 : index
      %c0_67 = arith.constant 0 : index
      %c0_68 = arith.constant 0 : index
      %81 = vector.load %arg17[%c0_66, %c0_67, %c0_68] : memref<4x8x1xf32, #tpu.memory_space<vmem>>, vector<4x8x1xf32>
      tpu.vector_store %arg17[%c0_66, %c0_67, %c0_68], %80 {strides = array<i32>} : memref<4x8x1xf32, #tpu.memory_space<vmem>>, vector<4x8x1xf32>,
      %cst_69 = arith.constant 0.000000e+00 : f32
      %82 = vector.broadcast %cst_69 : f32 to vector<4x8x1xf32>
      %c0_70 = arith.constant 0 : index
      %c0_71 = arith.constant 0 : index
      %c0_72 = arith.constant 0 : index
      %83 = vector.load %arg18[%c0_70, %c0_71, %c0_72] : memref<4x8x1xf32, #tpu.memory_space<vmem>>, vector<4x8x1xf32>
      tpu.vector_store %arg18[%c0_70, %c0_71, %c0_72], %82 {strides = array<i32>} : memref<4x8x1xf32, #tpu.memory_space<vmem>>, vector<4x8x1xf32>,
      %cst_73 = arith.constant 0.000000e+00 : f32
      %84 = vector.broadcast %cst_73 : f32 to vector<4x8x8xf32>
      %c0_74 = arith.constant 0 : index
      %c0_75 = arith.constant 0 : index
      %c0_76 = arith.constant 0 : index
      %85 = vector.load %arg19[%c0_74, %c0_75, %c0_76] : memref<4x8x8xf32, #tpu.memory_space<vmem>>, vector<4x8x8xf32>
      tpu.vector_store %arg19[%c0_74, %c0_75, %c0_76], %84 {strides = array<i32>} : memref<4x8x8xf32, #tpu.memory_space<vmem>>, vector<4x8x8xf32>,
      %c0_77 = arith.constant 0 : index
      %c0_78 = arith.constant 0 : index
      %c0_79 = arith.constant 0 : index
      %86 = vector.load %arg3[%c0_77, %c0_78, %c0_79] : memref<1x8x32xf32, #tpu.memory_space<vmem>>, vector<1x8x32xf32>
      %87 = vector.shape_cast %86 : vector<1x8x32xf32> to vector<8x32xf32>
      %c0_80 = arith.constant 0 : index
      %c0_81 = arith.constant 0 : index
      %88 = vector.load %arg5[%c0_80, %c0_81] : memref<32x32xf32, #tpu.memory_space<vmem>>, vector<32x32xf32>
      %cst_82 = arith.constant dense<0.000000e+00> : vector<8x32xf32>
      %89 = tpu.matmul %87, %88, %cst_82 {dimension_numbers = #tpu.dot_dimension_numbers<[1], [0], [0], [1], [0, 0, 1, 1], [], []>} : vector<8x32xf32>, vector<32x32xf32>, vector<8x32xf32> -> vector<8x32xf32>
      %c0_83 = arith.constant 0 : index
      %c0_84 = arith.constant 0 : index
      %90 = vector.load %arg6[%c0_83, %c0_84] : memref<1x32xf32, #tpu.memory_space<vmem>>, vector<1x32xf32>
      %91 = vector.shape_cast %90 : vector<1x32xf32> to vector<32xf32>
      %92 = vector.shape_cast %91 : vector<32xf32> to vector<1x32xf32>
      %93 = vector.broadcast %92 : vector<1x32xf32> to vector<8x32xf32>
      %94 = arith.addf %89, %93 : vector<8x32xf32>
      %cst_85 = arith.constant 0.353553385 : f32
      %95 = vector.broadcast %cst_85 : f32 to vector<8x32xf32>
      %96 = arith.mulf %94, %95 : vector<8x32xf32>
      %97 = vector.extract_strided_slice %96 {offsets = [0, 0], sizes = [8, 8], strides = [1, 1]} : vector<8x32xf32> to vector<8x8xf32>
      %c0_86 = arith.constant 0 : index
      %c0_87 = arith.constant 0 : index
      %c0_88 = arith.constant 0 : index
      %98 = vector.load %arg14[%c0_86, %c0_87, %c0_88] : memref<4x8x8xf32, #tpu.memory_space<vmem>>, vector<1x8x8xf32>
      %99 = vector.shape_cast %98 : vector<1x8x8xf32> to vector<8x8xf32>
      %100 = vector.shape_cast %97 : vector<8x8xf32> to vector<1x8x8xf32>
      tpu.vector_store %arg14[%c0_86, %c0_87, %c0_88], %100 {strides = array<i32>} : memref<4x8x8xf32, #tpu.memory_space<vmem>>, vector<1x8x8xf32>,
      %101 = vector.extract_strided_slice %96 {offsets = [0, 8], sizes = [8, 8], strides = [1, 1]} : vector<8x32xf32> to vector<8x8xf32>
      %c1_89 = arith.constant 1 : index
      %c0_90 = arith.constant 0 : index
      %c0_91 = arith.constant 0 : index
      %102 = vector.load %arg14[%c1_89, %c0_90, %c0_91] : memref<4x8x8xf32, #tpu.memory_space<vmem>>, vector<1x8x8xf32>
      %103 = vector.shape_cast %102 : vector<1x8x8xf32> to vector<8x8xf32>
      %104 = vector.shape_cast %101 : vector<8x8xf32> to vector<1x8x8xf32>
      tpu.vector_store %arg14[%c1_89, %c0_90, %c0_91], %104 {strides = array<i32>} : memref<4x8x8xf32, #tpu.memory_space<vmem>>, vector<1x8x8xf32>,
      %105 = vector.extract_strided_slice %96 {offsets = [0, 16], sizes = [8, 8], strides = [1, 1]} : vector<8x32xf32> to vector<8x8xf32>
      %c2_92 = arith.constant 2 : index
      %c0_93 = arith.constant 0 : index
      %c0_94 = arith.constant 0 : index
      %106 = vector.load %arg14[%c2_92, %c0_93, %c0_94] : memref<4x8x8xf32, #tpu.memory_space<vmem>>, vector<1x8x8xf32>
      %107 = vector.shape_cast %106 : vector<1x8x8xf32> to vector<8x8xf32>
      %108 = vector.shape_cast %105 : vector<8x8xf32> to vector<1x8x8xf32>
      tpu.vector_store %arg14[%c2_92, %c0_93, %c0_94], %108 {strides = array<i32>} : memref<4x8x8xf32, #tpu.memory_space<vmem>>, vector<1x8x8xf32>,
      %109 = vector.extract_strided_slice %96 {offsets = [0, 24], sizes = [8, 8], strides = [1, 1]} : vector<8x32xf32> to vector<8x8xf32>
      %c3_95 = arith.constant 3 : index
      %c0_96 = arith.constant 0 : index
      %c0_97 = arith.constant 0 : index
      %110 = vector.load %arg14[%c3_95, %c0_96, %c0_97] : memref<4x8x8xf32, #tpu.memory_space<vmem>>, vector<1x8x8xf32>
      %111 = vector.shape_cast %110 : vector<1x8x8xf32> to vector<8x8xf32>
      %112 = vector.shape_cast %109 : vector<8x8xf32> to vector<1x8x8xf32>
      tpu.vector_store %arg14[%c3_95, %c0_96, %c0_97], %112 {strides = array<i32>} : memref<4x8x8xf32, #tpu.memory_space<vmem>>, vector<1x8x8xf32>,
    } else {
    }
    %c0 = arith.constant 0 : index
    %c0_1 = arith.constant 0 : index
    %c0_2 = arith.constant 0 : index
    %3 = vector.load %arg4[%c0, %c0_1, %c0_2] : memref<1x8x32xf32, #tpu.memory_space<vmem>>, vector<1x8x32xf32>
    %4 = vector.shape_cast %3 : vector<1x8x32xf32> to vector<8x32xf32>
    %c0_3 = arith.constant 0 : index
    %c0_4 = arith.constant 0 : index
    %5 = vector.load %arg7[%c0_3, %c0_4] : memref<32x32xf32, #tpu.memory_space<vmem>>, vector<32x32xf32>
    %cst = arith.constant dense<0.000000e+00> : vector<8x32xf32>
    %6 = tpu.matmul %4, %5, %cst {dimension_numbers = #tpu.dot_dimension_numbers<[1], [0], [0], [1], [0, 0, 1, 1], [], []>} : vector<8x32xf32>, vector<32x32xf32>, vector<8x32xf32> -> vector<8x32xf32>
    %c0_5 = arith.constant 0 : index
    %c0_6 = arith.constant 0 : index
    %7 = vector.load %arg8[%c0_5, %c0_6] : memref<1x32xf32, #tpu.memory_space<vmem>>, vector<1x32xf32>
    %8 = vector.shape_cast %7 : vector<1x32xf32> to vector<32xf32>
    %9 = vector.shape_cast %8 : vector<32xf32> to vector<1x32xf32>
    %10 = vector.broadcast %9 : vector<1x32xf32> to vector<8x32xf32>
    %11 = arith.addf %6, %10 : vector<8x32xf32>
    %c0_7 = arith.constant 0 : index
    %c0_8 = arith.constant 0 : index
    %12 = vector.load %arg9[%c0_7, %c0_8] : memref<32x32xf32, #tpu.memory_space<vmem>>, vector<32x32xf32>
    %cst_9 = arith.constant dense<0.000000e+00> : vector<8x32xf32>
    %13 = tpu.matmul %4, %12, %cst_9 {dimension_numbers = #tpu.dot_dimension_numbers<[1], [0], [0], [1], [0, 0, 1, 1], [], []>} : vector<8x32xf32>, vector<32x32xf32>, vector<8x32xf32> -> vector<8x32xf32>
    %c0_10 = arith.constant 0 : index
    %c0_11 = arith.constant 0 : index
    %14 = vector.load %arg10[%c0_10, %c0_11] : memref<1x32xf32, #tpu.memory_space<vmem>>, vector<1x32xf32>
    %15 = vector.shape_cast %14 : vector<1x32xf32> to vector<32xf32>
    %16 = vector.shape_cast %15 : vector<32xf32> to vector<1x32xf32>
    %17 = vector.broadcast %16 : vector<1x32xf32> to vector<8x32xf32>
    %18 = arith.addf %13, %17 : vector<8x32xf32>
    %19 = vector.extract_strided_slice %11 {offsets = [0, 0], sizes = [8, 8], strides = [1, 1]} : vector<8x32xf32> to vector<8x8xf32>
    %c0_12 = arith.constant 0 : index
    %c0_13 = arith.constant 0 : index
    %c0_14 = arith.constant 0 : index
    %20 = vector.load %arg15[%c0_12, %c0_13, %c0_14] : memref<4x8x8xf32, #tpu.memory_space<vmem>>, vector<1x8x8xf32>
    %21 = vector.shape_cast %20 : vector<1x8x8xf32> to vector<8x8xf32>
    %22 = vector.shape_cast %19 : vector<8x8xf32> to vector<1x8x8xf32>
    tpu.vector_store %arg15[%c0_12, %c0_13, %c0_14], %22 {strides = array<i32>} : memref<4x8x8xf32, #tpu.memory_space<vmem>>, vector<1x8x8xf32>,
    %23 = vector.extract_strided_slice %18 {offsets = [0, 0], sizes = [8, 8], strides = [1, 1]} : vector<8x32xf32> to vector<8x8xf32>
    %c0_15 = arith.constant 0 : index
    %c0_16 = arith.constant 0 : index
    %c0_17 = arith.constant 0 : index
    %24 = vector.load %arg16[%c0_15, %c0_16, %c0_17] : memref<4x8x8xf32, #tpu.memory_space<vmem>>, vector<1x8x8xf32>
    %25 = vector.shape_cast %24 : vector<1x8x8xf32> to vector<8x8xf32>
    %26 = vector.shape_cast %23 : vector<8x8xf32> to vector<1x8x8xf32>
    tpu.vector_store %arg16[%c0_15, %c0_16, %c0_17], %26 {strides = array<i32>} : memref<4x8x8xf32, #tpu.memory_space<vmem>>, vector<1x8x8xf32>,
    %27 = vector.extract_strided_slice %11 {offsets = [0, 8], sizes = [8, 8], strides = [1, 1]} : vector<8x32xf32> to vector<8x8xf32>
    %c1 = arith.constant 1 : index
    %c0_18 = arith.constant 0 : index
    %c0_19 = arith.constant 0 : index
    %28 = vector.load %arg15[%c1, %c0_18, %c0_19] : memref<4x8x8xf32, #tpu.memory_space<vmem>>, vector<1x8x8xf32>
    %29 = vector.shape_cast %28 : vector<1x8x8xf32> to vector<8x8xf32>
    %30 = vector.shape_cast %27 : vector<8x8xf32> to vector<1x8x8xf32>
    tpu.vector_store %arg15[%c1, %c0_18, %c0_19], %30 {strides = array<i32>} : memref<4x8x8xf32, #tpu.memory_space<vmem>>, vector<1x8x8xf32>,
    %31 = vector.extract_strided_slice %18 {offsets = [0, 8], sizes = [8, 8], strides = [1, 1]} : vector<8x32xf32> to vector<8x8xf32>
    %c1_20 = arith.constant 1 : index
    %c0_21 = arith.constant 0 : index
    %c0_22 = arith.constant 0 : index
    %32 = vector.load %arg16[%c1_20, %c0_21, %c0_22] : memref<4x8x8xf32, #tpu.memory_space<vmem>>, vector<1x8x8xf32>
    %33 = vector.shape_cast %32 : vector<1x8x8xf32> to vector<8x8xf32>
    %34 = vector.shape_cast %31 : vector<8x8xf32> to vector<1x8x8xf32>
    tpu.vector_store %arg16[%c1_20, %c0_21, %c0_22], %34 {strides = array<i32>} : memref<4x8x8xf32, #tpu.memory_space<vmem>>, vector<1x8x8xf32>,
    %35 = vector.extract_strided_slice %11 {offsets = [0, 16], sizes = [8, 8], strides = [1, 1]} : vector<8x32xf32> to vector<8x8xf32>
    %c2 = arith.constant 2 : index
    %c0_23 = arith.constant 0 : index
    %c0_24 = arith.constant 0 : index
    %36 = vector.load %arg15[%c2, %c0_23, %c0_24] : memref<4x8x8xf32, #tpu.memory_space<vmem>>, vector<1x8x8xf32>
    %37 = vector.shape_cast %36 : vector<1x8x8xf32> to vector<8x8xf32>
    %38 = vector.shape_cast %35 : vector<8x8xf32> to vector<1x8x8xf32>
    tpu.vector_store %arg15[%c2, %c0_23, %c0_24], %38 {strides = array<i32>} : memref<4x8x8xf32, #tpu.memory_space<vmem>>, vector<1x8x8xf32>,
    %39 = vector.extract_strided_slice %18 {offsets = [0, 16], sizes = [8, 8], strides = [1, 1]} : vector<8x32xf32> to vector<8x8xf32>
    %c2_25 = arith.constant 2 : index
    %c0_26 = arith.constant 0 : index
    %c0_27 = arith.constant 0 : index
    %40 = vector.load %arg16[%c2_25, %c0_26, %c0_27] : memref<4x8x8xf32, #tpu.memory_space<vmem>>, vector<1x8x8xf32>
    %41 = vector.shape_cast %40 : vector<1x8x8xf32> to vector<8x8xf32>
    %42 = vector.shape_cast %39 : vector<8x8xf32> to vector<1x8x8xf32>
    tpu.vector_store %arg16[%c2_25, %c0_26, %c0_27], %42 {strides = array<i32>} : memref<4x8x8xf32, #tpu.memory_space<vmem>>, vector<1x8x8xf32>,
    %43 = vector.extract_strided_slice %11 {offsets = [0, 24], sizes = [8, 8], strides = [1, 1]} : vector<8x32xf32> to vector<8x8xf32>
    %c3 = arith.constant 3 : index
    %c0_28 = arith.constant 0 : index
    %c0_29 = arith.constant 0 : index
    %44 = vector.load %arg15[%c3, %c0_28, %c0_29] : memref<4x8x8xf32, #tpu.memory_space<vmem>>, vector<1x8x8xf32>
    %45 = vector.shape_cast %44 : vector<1x8x8xf32> to vector<8x8xf32>
    %46 = vector.shape_cast %43 : vector<8x8xf32> to vector<1x8x8xf32>
    tpu.vector_store %arg15[%c3, %c0_28, %c0_29], %46 {strides = array<i32>} : memref<4x8x8xf32, #tpu.memory_space<vmem>>, vector<1x8x8xf32>,
    %47 = vector.extract_strided_slice %18 {offsets = [0, 24], sizes = [8, 8], strides = [1, 1]} : vector<8x32xf32> to vector<8x8xf32>
    %c3_30 = arith.constant 3 : index
    %c0_31 = arith.constant 0 : index
    %c0_32 = arith.constant 0 : index
    %48 = vector.load %arg16[%c3_30, %c0_31, %c0_32] : memref<4x8x8xf32, #tpu.memory_space<vmem>>, vector<1x8x8xf32>
    %49 = vector.shape_cast %48 : vector<1x8x8xf32> to vector<8x8xf32>
    %50 = vector.shape_cast %47 : vector<8x8xf32> to vector<1x8x8xf32>
    tpu.vector_store %arg16[%c3_30, %c0_31, %c0_32], %50 {strides = array<i32>} : memref<4x8x8xf32, #tpu.memory_space<vmem>>, vector<1x8x8xf32>,
    %c0_33 = arith.constant 0 : index
    %c0_34 = arith.constant 0 : index
    %c0_35 = arith.constant 0 : index
    %51 = vector.load %arg14[%c0_33, %c0_34, %c0_35] : memref<4x8x8xf32, #tpu.memory_space<vmem>>, vector<4x8x8xf32>
    %c0_36 = arith.constant 0 : index
    %c0_37 = arith.constant 0 : index
    %c0_38 = arith.constant 0 : index
    %52 = vector.load %arg15[%c0_36, %c0_37, %c0_38] : memref<4x8x8xf32, #tpu.memory_space<vmem>>, vector<4x8x8xf32>
    "tpu.trace_start"() <{level = 10 : i32, message = "hqd,hkd->hqk"}> : () -> ()
    %cst_39 = arith.constant dense<0.000000e+00> : vector<4x8x8xf32>
    %53 = tpu.matmul %51, %52, %cst_39 {dimension_numbers = #tpu.dot_dimension_numbers<[2], [2], [1], [1], [0, 0, 0, 1, 1, 1], [0], [0]>} : vector<4x8x8xf32>, vector<4x8x8xf32>, vector<4x8x8xf32> -> vector<4x8x8xf32>
    "tpu.trace_stop"() : () -> ()
    %c0_40 = arith.constant 0 : index
    %c0_41 = arith.constant 0 : index
    %c0_42 = arith.constant 0 : index
    %54 = vector.load %arg17[%c0_40, %c0_41, %c0_42] : memref<4x8x1xf32, #tpu.memory_space<vmem>>, vector<4x8x1xf32>
    %cst_43 = arith.constant dense<0xFF800000> : vector<4x8xf32>
    %55 = vector.multi_reduction <maximumf>, %53, %cst_43 [2] : vector<4x8x8xf32> to vector<4x8xf32>
    %56 = vector.shape_cast %55 : vector<4x8xf32> to vector<4x8x1xf32>
    %57 = arith.maximumf %54, %56 : vector<4x8x1xf32>
    %58 = arith.subf %54, %57 : vector<4x8x1xf32>
    %59 = math.exp %58 : vector<4x8x1xf32>
    %60 = vector.broadcast %57 : vector<4x8x1xf32> to vector<4x8x8xf32>
    %61 = arith.subf %53, %60 : vector<4x8x8xf32>
    %62 = math.exp %61 : vector<4x8x8xf32>
    %c0_44 = arith.constant 0 : index
    %c0_45 = arith.constant 0 : index
    %c0_46 = arith.constant 0 : index
    %63 = vector.load %arg18[%c0_44, %c0_45, %c0_46] : memref<4x8x1xf32, #tpu.memory_space<vmem>>, vector<4x8x1xf32>
    %64 = arith.mulf %59, %63 : vector<4x8x1xf32>
    %cst_47 = arith.constant dense<0.000000e+00> : vector<4x8xf32>
    %65 = vector.multi_reduction <add>, %62, %cst_47 [2] : vector<4x8x8xf32> to vector<4x8xf32>
    %66 = vector.shape_cast %65 : vector<4x8xf32> to vector<4x8x1xf32>
    %67 = arith.addf %64, %66 : vector<4x8x1xf32>
    %c0_48 = arith.constant 0 : index
    %c0_49 = arith.constant 0 : index
    %c0_50 = arith.constant 0 : index
    %68 = vector.load %arg18[%c0_48, %c0_49, %c0_50] : memref<4x8x1xf32, #tpu.memory_space<vmem>>, vector<4x8x1xf32>
    tpu.vector_store %arg18[%c0_48, %c0_49, %c0_50], %67 {strides = array<i32>} : memref<4x8x1xf32, #tpu.memory_space<vmem>>, vector<4x8x1xf32>,
    %c0_51 = arith.constant 0 : index
    %c0_52 = arith.constant 0 : index
    %c0_53 = arith.constant 0 : index
    %69 = vector.load %arg16[%c0_51, %c0_52, %c0_53] : memref<4x8x8xf32, #tpu.memory_space<vmem>>, vector<4x8x8xf32>
    "tpu.trace_start"() <{level = 10 : i32, message = "hqk,hkv->hqv"}> : () -> ()
    %cst_54 = arith.constant dense<0.000000e+00> : vector<4x8x8xf32>
    %70 = tpu.matmul %62, %69, %cst_54 {dimension_numbers = #tpu.dot_dimension_numbers<[2], [1], [1], [2], [0, 0, 0, 1, 1, 2], [0], [0]>} : vector<4x8x8xf32>, vector<4x8x8xf32>, vector<4x8x8xf32> -> vector<4x8x8xf32>
    "tpu.trace_stop"() : () -> ()
    %c0_55 = arith.constant 0 : index
    %c0_56 = arith.constant 0 : index
    %c0_57 = arith.constant 0 : index
    %71 = vector.load %arg19[%c0_55, %c0_56, %c0_57] : memref<4x8x8xf32, #tpu.memory_space<vmem>>, vector<4x8x8xf32>
    %72 = vector.broadcast %59 : vector<4x8x1xf32> to vector<4x8x8xf32>
    %73 = arith.mulf %72, %71 : vector<4x8x8xf32>
    %74 = arith.addf %73, %70 : vector<4x8x8xf32>
    %c0_58 = arith.constant 0 : index
    %c0_59 = arith.constant 0 : index
    %c0_60 = arith.constant 0 : index
    %75 = vector.load %arg19[%c0_58, %c0_59, %c0_60] : memref<4x8x8xf32, #tpu.memory_space<vmem>>, vector<4x8x8xf32>
    tpu.vector_store %arg19[%c0_58, %c0_59, %c0_60], %74 {strides = array<i32>} : memref<4x8x8xf32, #tpu.memory_space<vmem>>, vector<4x8x8xf32>,
    %c0_61 = arith.constant 0 : index
    %c0_62 = arith.constant 0 : index
    %c0_63 = arith.constant 0 : index
    %76 = vector.load %arg17[%c0_61, %c0_62, %c0_63] : memref<4x8x1xf32, #tpu.memory_space<vmem>>, vector<4x8x1xf32>
    tpu.vector_store %arg17[%c0_61, %c0_62, %c0_63], %57 {strides = array<i32>} : memref<4x8x1xf32, #tpu.memory_space<vmem>>, vector<4x8x1xf32>,
    %c1_i32 = arith.constant 1 : i32
    %77 = arith.cmpi eq, %arg2, %c1_i32 : i32
    %78 = arith.extui %77 : i1 to i32
    %c0_i32_64 = arith.constant 0 : i32
    %79 = arith.cmpi ne, %78, %c0_i32_64 : i32
    scf.if %79 {
      %c0_65 = arith.constant 0 : index
      %c0_66 = arith.constant 0 : index
      %c0_67 = arith.constant 0 : index
      %80 = vector.load %arg18[%c0_65, %c0_66, %c0_67] : memref<4x8x1xf32, #tpu.memory_space<vmem>>, vector<4x8x1xf32>
      %81 = tpu.reciprocal %80 : vector<4x8x1xf32> -> vector<4x8x1xf32>
      %c0_68 = arith.constant 0 : index
      %c0_69 = arith.constant 0 : index
      %c0_70 = arith.constant 0 : index
      %82 = vector.load %arg19[%c0_68, %c0_69, %c0_70] : memref<4x8x8xf32, #tpu.memory_space<vmem>>, vector<4x8x8xf32>
      %83 = vector.broadcast %81 : vector<4x8x1xf32> to vector<4x8x8xf32>
      %84 = arith.mulf %82, %83 : vector<4x8x8xf32>
      %c0_71 = arith.constant 0 : index
      %c0_72 = arith.constant 0 : index
      %c0_73 = arith.constant 0 : index
      %85 = vector.load %arg11[%c0_71, %c0_72, %c0_73] : memref<4x8x32xf32, #tpu.memory_space<vmem>>, vector<4x8x32xf32>
      "tpu.trace_start"() <{level = 10 : i32, message = "hqv,hvd->hqd"}> : () -> ()
      %cst_74 = arith.constant dense<0.000000e+00> : vector<4x8x32xf32>
      %86 = tpu.matmul %84, %85, %cst_74 {dimension_numbers = #tpu.dot_dimension_numbers<[2], [1], [1], [2], [0, 0, 0, 1, 1, 2], [0], [0]>} : vector<4x8x8xf32>, vector<4x8x32xf32>, vector<4x8x32xf32> -> vector<4x8x32xf32>
      "tpu.trace_stop"() : () -> ()
      %87 = vector.extract_strided_slice %86 {offsets = [0, 0, 0], sizes = [1, 8, 32], strides = [1, 1, 1]} : vector<4x8x32xf32> to vector<1x8x32xf32>
      %88 = vector.shape_cast %87 : vector<1x8x32xf32> to vector<8x32xf32>
      %89 = vector.extract_strided_slice %86 {offsets = [1, 0, 0], sizes = [1, 8, 32], strides = [1, 1, 1]} : vector<4x8x32xf32> to vector<1x8x32xf32>
      %90 = vector.shape_cast %89 : vector<1x8x32xf32> to vector<8x32xf32>
      %91 = arith.addf %88, %90 : vector<8x32xf32>
      %92 = vector.extract_strided_slice %86 {offsets = [2, 0, 0], sizes = [1, 8, 32], strides = [1, 1, 1]} : vector<4x8x32xf32> to vector<1x8x32xf32>
      %93 = vector.shape_cast %92 : vector<1x8x32xf32> to vector<8x32xf32>
      %94 = arith.addf %91, %93 : vector<8x32xf32>
      %95 = vector.extract_strided_slice %86 {offsets = [3, 0, 0], sizes = [1, 8, 32], strides = [1, 1, 1]} : vector<4x8x32xf32> to vector<1x8x32xf32>
      %96 = vector.shape_cast %95 : vector<1x8x32xf32> to vector<8x32xf32>
      %97 = arith.addf %94, %96 : vector<8x32xf32>
      %c0_75 = arith.constant 0 : index
      %c0_76 = arith.constant 0 : index
      %98 = vector.load %arg12[%c0_75, %c0_76] : memref<1x32xf32, #tpu.memory_space<vmem>>, vector<1x32xf32>
      %99 = vector.shape_cast %98 : vector<1x32xf32> to vector<32xf32>
      %100 = vector.shape_cast %99 : vector<32xf32> to vector<1x32xf32>
      %101 = vector.broadcast %100 : vector<1x32xf32> to vector<8x32xf32>
      %102 = arith.addf %97, %101 : vector<8x32xf32>
      %c0_77 = arith.constant 0 : index
      %c0_78 = arith.constant 0 : index
      %c0_79 = arith.constant 0 : index
      %103 = vector.load %arg13[%c0_77, %c0_78, %c0_79] : memref<1x8x32xf32, #tpu.memory_space<vmem>>, vector<1x8x32xf32>
      %104 = vector.shape_cast %103 : vector<1x8x32xf32> to vector<8x32xf32>
      %105 = vector.shape_cast %102 : vector<8x32xf32> to vector<1x8x32xf32>
      tpu.vector_store %arg13[%c0_77, %c0_78, %c0_79], %105 {strides = array<i32>} : memref<1x8x32xf32, #tpu.memory_space<vmem>>, vector<1x8x32xf32>,
    } else {
    }
    return
  }
  func.func @transform_0(%arg0: i32, %arg1: i32, %arg2: i32) -> (i32, i32, i32) {
    %c0_i32 = arith.constant 0 : i32
    %c0_i32_0 = arith.constant 0 : i32
    return %arg0, %arg1, %c0_i32 : i32, i32, i32
  }
  func.func @transform_1(%arg0: i32, %arg1: i32, %arg2: i32) -> (i32, i32, i32) {
    %c0_i32 = arith.constant 0 : i32
    %c0_i32_0 = arith.constant 0 : i32
    return %arg0, %arg2, %c0_i32 : i32, i32, i32
  }
  func.func @transform_2(%arg0: i32, %arg1: i32, %arg2: i32) -> (i32, i32) {
    %c0_i32 = arith.constant 0 : i32
    %c0_i32_0 = arith.constant 0 : i32
    %c0_i32_1 = arith.constant 0 : i32
    return %c0_i32, %c0_i32_0 : i32, i32
  }
  func.func @transform_3(%arg0: i32, %arg1: i32, %arg2: i32) -> (i32, i32) {
    %c0_i32 = arith.constant 0 : i32
    %c0_i32_0 = arith.constant 0 : i32
    %c0_i32_1 = arith.constant 0 : i32
    return %c0_i32, %c0_i32_0 : i32, i32
  }
  func.func @transform_4(%arg0: i32, %arg1: i32, %arg2: i32) -> (i32, i32) {
    %c0_i32 = arith.constant 0 : i32
    %c0_i32_0 = arith.constant 0 : i32
    %c0_i32_1 = arith.constant 0 : i32
    return %c0_i32, %c0_i32_0 : i32, i32
  }
  func.func @transform_5(%arg0: i32, %arg1: i32, %arg2: i32) -> (i32, i32) {
    %c0_i32 = arith.constant 0 : i32
    %c0_i32_0 = arith.constant 0 : i32
    %c0_i32_1 = arith.constant 0 : i32
    return %c0_i32, %c0_i32_0 : i32, i32
  }
  func.func @transform_6(%arg0: i32, %arg1: i32, %arg2: i32) -> (i32, i32) {
    %c0_i32 = arith.constant 0 : i32
    %c0_i32_0 = arith.constant 0 : i32
    %c0_i32_1 = arith.constant 0 : i32
    return %c0_i32, %c0_i32_0 : i32, i32
  }
  func.func @transform_7(%arg0: i32, %arg1: i32, %arg2: i32) -> (i32, i32) {
    %c0_i32 = arith.constant 0 : i32
    %c0_i32_0 = arith.constant 0 : i32
    %c0_i32_1 = arith.constant 0 : i32
    return %c0_i32, %c0_i32_0 : i32, i32
  }
  func.func @transform_8(%arg0: i32, %arg1: i32, %arg2: i32) -> (i32, i32, i32) {
    %c0_i32 = arith.constant 0 : i32
    %c0_i32_0 = arith.constant 0 : i32
    %c0_i32_1 = arith.constant 0 : i32
    %c0_i32_2 = arith.constant 0 : i32
    return %c0_i32, %c0_i32_0, %c0_i32_1 : i32, i32, i32
  }
  func.func @transform_9(%arg0: i32, %arg1: i32, %arg2: i32) -> (i32, i32) {
    %c0_i32 = arith.constant 0 : i32
    %c0_i32_0 = arith.constant 0 : i32
    %c0_i32_1 = arith.constant 0 : i32
    return %c0_i32, %c0_i32_0 : i32, i32
  }
  func.func @transform_10(%arg0: i32, %arg1: i32, %arg2: i32) -> (i32, i32, i32) {
    %c0_i32 = arith.constant 0 : i32
    %c0_i32_0 = arith.constant 0 : i32
    return %arg0, %arg1, %c0_i32 : i32, i32, i32
  }
}

</mosaic_0001>

<llo_original>
// kernel: tpu_custom_call.1
$region0: #{tpu_custom_call.1}
  #allocation0 [shape = 'u32[]', space=smem, size = 0x4, offset = 0x4, fixed_abs, tag = 'smem constant byte address 0x4 - core index']
  #allocation1 [shape = 'u32[144,128]{1,0:T(1,128)}', space=vmem, size = 0x12000, scoped, tag = 'internal scratch']
  #allocation2 [shape = 'f32[4,8,8]{2,1,0:T(8,128)}', space=vmem, size = 0x4000, scoped, tag = 'scratch operand']
  #allocation3 [shape = 'f32[4,8,8]{2,1,0:T(8,128)}', space=vmem, size = 0x4000, scoped, tag = 'scratch operand']
  #allocation4 [shape = 'f32[4,8,8]{2,1,0:T(8,128)}', space=vmem, size = 0x4000, scoped, tag = 'scratch operand']
  #allocation5 [shape = 'f32[4,8,1]{2,1,0:T(8,128)}', space=vmem, size = 0x4000, scoped, tag = 'scratch operand']
  #allocation6 [shape = 'f32[4,8,1]{2,1,0:T(8,128)}', space=vmem, size = 0x4000, scoped, tag = 'scratch operand']
  #allocation7 [shape = 'f32[4,8,8]{2,1,0:T(8,128)}', space=vmem, size = 0x4000, scoped, tag = 'scratch operand']
  %s0 = inlined_call_operand.hbm [shape: f32[2,16,32], index: 0, kind: input, shape index: {}]
  %s1 = inlined_call_operand.hbm [shape: f32[2,16,32], index: 1, kind: input, shape index: {}]
  %s2 = inlined_call_operand.hbm [shape: f32[32,32], index: 2, kind: input, shape index: {}]
  %s3 = inlined_call_operand.hbm [shape: f32[1,32], index: 3, kind: input, shape index: {}]
  %s4 = inlined_call_operand.hbm [shape: f32[32,32], index: 4, kind: input, shape index: {}]
  %s5 = inlined_call_operand.hbm [shape: f32[1,32], index: 5, kind: input, shape index: {}]
  %s6 = inlined_call_operand.hbm [shape: f32[32,32], index: 6, kind: input, shape index: {}]
  %s7 = inlined_call_operand.hbm [shape: f32[1,32], index: 7, kind: input, shape index: {}]
  %s8 = inlined_call_operand.hbm [shape: f32[4,8,32], index: 8, kind: input, shape index: {}]
  %s9 = inlined_call_operand.hbm [shape: f32[1,32], index: 9, kind: input, shape index: {}]
  %s10 = inlined_call_operand.hbm [shape: f32[2,16,32], index: 10, kind: output, shape index: {}]
  %s11 = sld [smem:[#allocation0]]
  $region121: #{tpu_custom_call.1} parent=0
    _
  %s13 = ssub.s32 1, %s11
  %s14 = scalar_select 0, %s13, %s11
  $region1: #{tpu_custom_call.1} parent=0
    #allocation8 [shape = 'u8[8192]{0}', space=vmem, size = 0x2000, scoped, tag = 'input window, operand 0']
    #allocation9 [shape = 's32[2]{0}', space=sflag, size = 0x8, scoped, tag = 'scoped memory for tpu_custom_call.1']
    #allocation10 [shape = 's32[2]{0}', space=sflag, size = 0x8, scoped, tag = 'scoped memory for tpu_custom_call.1']
    #allocation11 [shape = 'u8[8192]{0}', space=vmem, size = 0x2000, scoped, tag = 'input window, operand 1']
    #allocation12 [shape = 's32[2]{0}', space=sflag, size = 0x8, scoped, tag = 'scoped memory for tpu_custom_call.1']
    #allocation13 [shape = 'u8[16384]{0}', space=vmem, size = 0x4000, scoped, tag = 'input window, operand 2, single buffered']
    #allocation14 [shape = 'u8[512]{0}', space=vmem, size = 0x400, scoped, tag = 'input window, operand 3, single buffered']
    #allocation15 [shape = 's32[1]{0}', space=sflag, size = 0x4, scoped, tag = 'scoped memory for tpu_custom_call.1']
    #allocation16 [shape = 'u8[16384]{0}', space=vmem, size = 0x4000, scoped, tag = 'input window, operand 4, single buffered']
    #allocation17 [shape = 'u8[512]{0}', space=vmem, size = 0x400, scoped, tag = 'input window, operand 5, single buffered']
    #allocation18 [shape = 's32[1]{0}', space=sflag, size = 0x4, scoped, tag = 'scoped memory for tpu_custom_call.1']
    #allocation19 [shape = 'u8[16384]{0}', space=vmem, size = 0x4000, scoped, tag = 'input window, operand 6, single buffered']
    #allocation20 [shape = 'u8[512]{0}', space=vmem, size = 0x400, scoped, tag = 'input window, operand 7, single buffered']
    #allocation21 [shape = 's32[1]{0}', space=sflag, size = 0x4, scoped, tag = 'scoped memory for tpu_custom_call.1']
    #allocation22 [shape = 'u8[16384]{0}', space=vmem, size = 0x4000, scoped, tag = 'input window, operand 8, single buffered']
    #allocation23 [shape = 'u8[512]{0}', space=vmem, size = 0x400, scoped, tag = 'input window, operand 9, single buffered']
    #allocation24 [shape = 's32[1]{0}', space=sflag, size = 0x4, scoped, tag = 'scoped memory for tpu_custom_call.1']
    #allocation25 [shape = 'u8[8192]{0}', space=vmem, size = 0x2000, scoped, tag = 'output window, operand 0']
    %15 = vsyncpa [#allocation9], 0
    %s16 = scalar_lea.sflag [#allocation9], 1
    %17 = vsyncpa %s16, 0
    %18 = vsyncpa [#allocation12], 0
    %s19 = scalar_lea.sflag [#allocation12], 1
    %20 = vsyncpa %s19, 0
    %21 = vsyncpa [#allocation15], 0
    %22 = vsyncpa [#allocation18], 0
    %23 = vsyncpa [#allocation21], 0
    %24 = vsyncpa [#allocation24], 0
    %25 = vsyncpa [#allocation10], 0
    %s26 = scalar_lea.sflag [#allocation10], 1
    %27 = vsyncpa %s26, 0
    loop: start=0, step=1, limit=10
    $region2: #{tpu_custom_call.1} parent=1 // loop_pre_header
      _
    $region3: #{tpu_custom_call.1} parent=1 // loop_header
      %s29 = sphi 0, %s33
      %p30 = scmp.ge.s32.totalorder %s29, 10
      %s36 = sphi 0, %s55
      %s37 = sphi 0, %s51
      %s38 = sphi 0, %s47
      %s39 = sphi 0, %s36
      %s40 = sphi 0, %s37
      %s41 = sphi 0, %s38
      %s42 = sphi 0, %s39
      %s43 = sphi 0, %s40
      %s44 = sphi 0, %s41
      %s60 = sphi 0, %s62
      %s63 = sphi 0, %s60
      %s64 = sphi 0, %s63
      %s80 = sphi 0, %s64
      %s88 = sphi 0, %s90
      %s91 = sphi 0, %s88
      %s92 = sphi 0, %s91
      %s108 = sphi 0, %s92
      %s112 = sphi 0, %s112
      %s114 = sphi 0, %s112
      %s115 = sphi 0, %s114
      %s129 = sphi 0, %s115
      %s133 = sphi 0, %s133
      %s135 = sphi 0, %s133
      %s136 = sphi 0, %s135
      %s150 = sphi 0, %s136
      %s154 = sphi 0, %s154
      %s156 = sphi 0, %s154
      %s157 = sphi 0, %s156
      %s171 = sphi 0, %s157
      %s175 = sphi 0, %s175
      %s177 = sphi 0, %s175
      %s178 = sphi 0, %s177
      %s192 = sphi 0, %s178
      %s196 = sphi 0, %s196
      %s198 = sphi 0, %s196
      %s199 = sphi 0, %s198
      %s213 = sphi 0, %s199
      %s217 = sphi 0, %s217
      %s219 = sphi 0, %s217
      %s220 = sphi 0, %s219
      %s234 = sphi 0, %s220
      %s238 = sphi 0, %s238
      %s240 = sphi 0, %s238
      %s241 = sphi 0, %s240
      %s255 = sphi 0, %s241
      %s259 = sphi 0, %s259
      %s261 = sphi 0, %s259
      %s262 = sphi 0, %s261
      %s276 = sphi 0, %s262
      %s284 = sphi 0, %s286
      %s287 = sphi 0, %s284
      %s288 = sphi 0, %s287
      %s304 = sphi 0, %s288
    $region4: #{tpu_custom_call.1} parent=1 // loop_header_branch
      %32 = sbr.rel (%p30) target = $region8
    $region5: #{tpu_custom_call.1} parent=1 // loop_body
      %s34 = ssub.s32 %s29, 1
      %s35 = ssub.s32 %s29, 2
      %s45 = sadd.s32 1, %s38
      %p46 = scmp.ge.s32.totalorder %s45, 2
      %s47 = scalar_select %p46, 0, %s45
      %s48 = sadd.s32 1, %s37
      %s49 = scalar_select %p46, %s48, %s37
      %p50 = scmp.ge.s32.totalorder %s49, 2
      %s51 = scalar_select %p50, 0, %s49
      %s52 = sadd.s32 1, %s36
      %s53 = scalar_select %p50, %s52, %s36
      %p54 = scmp.ge.s32.totalorder %s53, 2
      %s55 = scalar_select %p54, 0, %s53
      %s56 = ssub.s32 %s36, %s55
      %s57 = ssub.s32 %s37, %s51
      %s58 = sor.u32 %s56, %s57
      %p59 = scmp.eq.s32.totalorder %s58, 0
      %s61 = sadd.s32 %s60, 1
      %s62 = scalar_select %p59, %s60, %s61
      %p65 = pneg %p59
      %p66 = scmp.eq.s32.totalorder %s29, 7
      %p67 = por %p65, %p66
      %p68 = scmp.ne.s32.totalorder %s60, %s63
      %p69 = scmp.eq.s32.totalorder %s29, 0
      %p70 = por %p68, %p69
      %p71 = scmp.ne.s32.totalorder %s60, %s63
      %p72 = scmp.eq.s32.totalorder %s34, 7
      %p73 = por %p71, %p72
      %p74 = scmp.ne.s32.totalorder %s63, %s64
      %p75 = scmp.eq.s32.totalorder %s34, 0
      %p76 = por %p74, %p75
      %p77 = scmp.ne.s32.totalorder %s63, %s64
      %p78 = scmp.eq.s32.totalorder %s35, 7
      %p79 = por %p77, %p78
      %p81 = scmp.ne.s32.totalorder %s64, %s80
      %p82 = scmp.eq.s32.totalorder %s35, 0
      %p83 = por %p81, %p82
      %s84 = ssub.s32 %s36, %s55
      %s85 = ssub.s32 %s38, %s47
      %s86 = sor.u32 %s84, %s85
      %p87 = scmp.eq.s32.totalorder %s86, 0
      %s89 = sadd.s32 %s88, 1
      %s90 = scalar_select %p87, %s88, %s89
      %p93 = pneg %p87
      %p94 = scmp.eq.s32.totalorder %s29, 7
      %p95 = por %p93, %p94
      %p96 = scmp.ne.s32.totalorder %s88, %s91
      %p97 = scmp.eq.s32.totalorder %s29, 0
      %p98 = por %p96, %p97
      %p99 = scmp.ne.s32.totalorder %s88, %s91
      %p100 = scmp.eq.s32.totalorder %s34, 7
      %p101 = por %p99, %p100
      %p102 = scmp.ne.s32.totalorder %s91, %s92
      %p103 = scmp.eq.s32.totalorder %s34, 0
      %p104 = por %p102, %p103
      %p105 = scmp.ne.s32.totalorder %s91, %s92
      %p106 = scmp.eq.s32.totalorder %s35, 7
      %p107 = por %p105, %p106
      %p109 = scmp.ne.s32.totalorder %s92, %s108
      %p110 = scmp.eq.s32.totalorder %s35, 0
      %p111 = por %p109, %p110
      %s113 = sadd.s32 %s112, 1
      %p116 = scmp.eq.s32.totalorder %s29, 7
      %p117 = scmp.ne.s32.totalorder %s112, %s114
      %p118 = scmp.eq.s32.totalorder %s29, 0
      %p119 = por %p117, %p118
      %p120 = scmp.ne.s32.totalorder %s112, %s114
      %p121 = scmp.eq.s32.totalorder %s34, 7
      %p122 = por %p120, %p121
      %p123 = scmp.ne.s32.totalorder %s114, %s115
      %p124 = scmp.eq.s32.totalorder %s34, 0
      %p125 = por %p123, %p124
      %p126 = scmp.ne.s32.totalorder %s114, %s115
      %p127 = scmp.eq.s32.totalorder %s35, 7
      %p128 = por %p126, %p127
      %p130 = scmp.ne.s32.totalorder %s115, %s129
      %p131 = scmp.eq.s32.totalorder %s35, 0
      %p132 = por %p130, %p131
      %s134 = sadd.s32 %s133, 1
      %p137 = scmp.eq.s32.totalorder %s29, 7
      %p138 = scmp.ne.s32.totalorder %s133, %s135
      %p139 = scmp.eq.s32.totalorder %s29, 0
      %p140 = por %p138, %p139
      %p141 = scmp.ne.s32.totalorder %s133, %s135
      %p142 = scmp.eq.s32.totalorder %s34, 7
      %p143 = por %p141, %p142
      %p144 = scmp.ne.s32.totalorder %s135, %s136
      %p145 = scmp.eq.s32.totalorder %s34, 0
      %p146 = por %p144, %p145
      %p147 = scmp.ne.s32.totalorder %s135, %s136
      %p148 = scmp.eq.s32.totalorder %s35, 7
      %p149 = por %p147, %p148
      %p151 = scmp.ne.s32.totalorder %s136, %s150
      %p152 = scmp.eq.s32.totalorder %s35, 0
      %p153 = por %p151, %p152
      %s155 = sadd.s32 %s154, 1
      %p158 = scmp.eq.s32.totalorder %s29, 7
      %p159 = scmp.ne.s32.totalorder %s154, %s156
      %p160 = scmp.eq.s32.totalorder %s29, 0
      %p161 = por %p159, %p160
      %p162 = scmp.ne.s32.totalorder %s154, %s156
      %p163 = scmp.eq.s32.totalorder %s34, 7
      %p164 = por %p162, %p163
      %p165 = scmp.ne.s32.totalorder %s156, %s157
      %p166 = scmp.eq.s32.totalorder %s34, 0
      %p167 = por %p165, %p166
      %p168 = scmp.ne.s32.totalorder %s156, %s157
      %p169 = scmp.eq.s32.totalorder %s35, 7
      %p170 = por %p168, %p169
      %p172 = scmp.ne.s32.totalorder %s157, %s171
      %p173 = scmp.eq.s32.totalorder %s35, 0
      %p174 = por %p172, %p173
      %s176 = sadd.s32 %s175, 1
      %p179 = scmp.eq.s32.totalorder %s29, 7
      %p180 = scmp.ne.s32.totalorder %s175, %s177
      %p181 = scmp.eq.s32.totalorder %s29, 0
      %p182 = por %p180, %p181
      %p183 = scmp.ne.s32.totalorder %s175, %s177
      %p184 = scmp.eq.s32.totalorder %s34, 7
      %p185 = por %p183, %p184
      %p186 = scmp.ne.s32.totalorder %s177, %s178
      %p187 = scmp.eq.s32.totalorder %s34, 0
      %p188 = por %p186, %p187
      %p189 = scmp.ne.s32.totalorder %s177, %s178
      %p190 = scmp.eq.s32.totalorder %s35, 7
      %p191 = por %p189, %p190
      %p193 = scmp.ne.s32.totalorder %s178, %s192
      %p194 = scmp.eq.s32.totalorder %s35, 0
      %p195 = por %p193, %p194
      %s197 = sadd.s32 %s196, 1
      %p200 = scmp.eq.s32.totalorder %s29, 7
      %p201 = scmp.ne.s32.totalorder %s196, %s198
      %p202 = scmp.eq.s32.totalorder %s29, 0
      %p203 = por %p201, %p202
      %p204 = scmp.ne.s32.totalorder %s196, %s198
      %p205 = scmp.eq.s32.totalorder %s34, 7
      %p206 = por %p204, %p205
      %p207 = scmp.ne.s32.totalorder %s198, %s199
      %p208 = scmp.eq.s32.totalorder %s34, 0
      %p209 = por %p207, %p208
      %p210 = scmp.ne.s32.totalorder %s198, %s199
      %p211 = scmp.eq.s32.totalorder %s35, 7
      %p212 = por %p210, %p211
      %p214 = scmp.ne.s32.totalorder %s199, %s213
      %p215 = scmp.eq.s32.totalorder %s35, 0
      %p216 = por %p214, %p215
      %s218 = sadd.s32 %s217, 1
      %p221 = scmp.eq.s32.totalorder %s29, 7
      %p222 = scmp.ne.s32.totalorder %s217, %s219
      %p223 = scmp.eq.s32.totalorder %s29, 0
      %p224 = por %p222, %p223
      %p225 = scmp.ne.s32.totalorder %s217, %s219
      %p226 = scmp.eq.s32.totalorder %s34, 7
      %p227 = por %p225, %p226
      %p228 = scmp.ne.s32.totalorder %s219, %s220
      %p229 = scmp.eq.s32.totalorder %s34, 0
      %p230 = por %p228, %p229
      %p231 = scmp.ne.s32.totalorder %s219, %s220
      %p232 = scmp.eq.s32.totalorder %s35, 7
      %p233 = por %p231, %p232
      %p235 = scmp.ne.s32.totalorder %s220, %s234
      %p236 = scmp.eq.s32.totalorder %s35, 0
      %p237 = por %p235, %p236
      %s239 = sadd.s32 %s238, 1
      %p242 = scmp.eq.s32.totalorder %s29, 7
      %p243 = scmp.ne.s32.totalorder %s238, %s240
      %p244 = scmp.eq.s32.totalorder %s29, 0
      %p245 = por %p243, %p244
      %p246 = scmp.ne.s32.totalorder %s238, %s240
      %p247 = scmp.eq.s32.totalorder %s34, 7
      %p248 = por %p246, %p247
      %p249 = scmp.ne.s32.totalorder %s240, %s241
      %p250 = scmp.eq.s32.totalorder %s34, 0
      %p251 = por %p249, %p250
      %p252 = scmp.ne.s32.totalorder %s240, %s241
      %p253 = scmp.eq.s32.totalorder %s35, 7
      %p254 = por %p252, %p253
      %p256 = scmp.ne.s32.totalorder %s241, %s255
      %p257 = scmp.eq.s32.totalorder %s35, 0
      %p258 = por %p256, %p257
      %s260 = sadd.s32 %s259, 1
      %p263 = scmp.eq.s32.totalorder %s29, 7
      %p264 = scmp.ne.s32.totalorder %s259, %s261
      %p265 = scmp.eq.s32.totalorder %s29, 0
      %p266 = por %p264, %p265
      %p267 = scmp.ne.s32.totalorder %s259, %s261
      %p268 = scmp.eq.s32.totalorder %s34, 7
      %p269 = por %p267, %p268
      %p270 = scmp.ne.s32.totalorder %s261, %s262
      %p271 = scmp.eq.s32.totalorder %s34, 0
      %p272 = por %p270, %p271
      %p273 = scmp.ne.s32.totalorder %s261, %s262
      %p274 = scmp.eq.s32.totalorder %s35, 7
      %p275 = por %p273, %p274
      %p277 = scmp.ne.s32.totalorder %s262, %s276
      %p278 = scmp.eq.s32.totalorder %s35, 0
      %p279 = por %p277, %p278
      %s280 = ssub.s32 %s36, %s55
      %s281 = ssub.s32 %s37, %s51
      %s282 = sor.u32 %s280, %s281
      %p283 = scmp.eq.s32.totalorder %s282, 0
      %s285 = sadd.s32 %s284, 1
      %s286 = scalar_select %p283, %s284, %s285
      %p289 = pneg %p283
      %p290 = scmp.eq.s32.totalorder %s29, 7
      %p291 = por %p289, %p290
      %p292 = scmp.ne.s32.totalorder %s284, %s287
      %p293 = scmp.eq.s32.totalorder %s29, 0
      %p294 = por %p292, %p293
      %p295 = scmp.ne.s32.totalorder %s284, %s287
      %p296 = scmp.eq.s32.totalorder %s34, 7
      %p297 = por %p295, %p296
      %p298 = scmp.ne.s32.totalorder %s287, %s288
      %p299 = scmp.eq.s32.totalorder %s34, 0
      %p300 = por %p298, %p299
      %p301 = scmp.ne.s32.totalorder %s287, %s288
      %p302 = scmp.eq.s32.totalorder %s35, 7
      %p303 = por %p301, %p302
      %p305 = scmp.ne.s32.totalorder %s288, %s304
      %p306 = scmp.eq.s32.totalorder %s35, 0
      %p307 = por %p305, %p306
      %p308 = scmp.le.s32.totalorder 1, %s29
      %p309 = scmp.lt.s32.totalorder %s29, 9
      %p310 = pnand %p308, %p309
      %p311 = pneg %p310
      // Predicated region
      $region9: #{tpu_custom_call.1} parent=5 // pred_check
        _
      $region10: #{tpu_custom_call.1} parent=5 // pred_check_branch
        %313 = sbr.rel (%p310) target = $region12
      $region11: #{tpu_custom_call.1} parent=5 // pred_region
        %s314 = ssub.s32 %s29, 1
        // Predicated region
        $region13: #{tpu_custom_call.1} parent=11 // pred_check
          %p315 = pneg %p125
        $region14: #{tpu_custom_call.1} parent=11 // pred_check_branch
          %317 = sbr.rel (%p315) target = $region16
        $region15: #{tpu_custom_call.1} parent=11 // pred_region
          %s319 = ssub.s32 512, 512
          %320 = vsyncadd [#allocation12], %s319
          %s321 = sshll.u32 [#allocation13], 4
          %s322 = int_to_ptr.vmem [resolvable:$true] %s321
          %327 = dma.hbm_to_vmem [thread:$0]  %s2, 512, %s322, [#allocation12], 128, 128, 8
        $region16: #{tpu_custom_call.1} parent=11 // pred_fallthru
          _
        // Predicated region
        $region17: #{tpu_custom_call.1} parent=11 // pred_check
          %p328 = pneg %p146
        $region18: #{tpu_custom_call.1} parent=11 // pred_check_branch
          %330 = sbr.rel (%p328) target = $region20
        $region19: #{tpu_custom_call.1} parent=11 // pred_region
          %s332 = ssub.s32 16, 16
          %333 = vsyncadd [#allocation15], %s332
          %s335 = sshll.u32 [#allocation14], 4
          %s336 = int_to_ptr.vmem [resolvable:$true] %s335
          %338 = dma.hbm_to_vmem [thread:$0]  %s3, 16, %s336, [#allocation15]
        $region20: #{tpu_custom_call.1} parent=11 // pred_fallthru
          _
        // Predicated region
        $region21: #{tpu_custom_call.1} parent=11 // pred_check
          %p339 = pneg %p167
        $region22: #{tpu_custom_call.1} parent=11 // pred_check_branch
          %341 = sbr.rel (%p339) target = $region24
        $region23: #{tpu_custom_call.1} parent=11 // pred_region
          %s343 = ssub.s32 512, 512
          %344 = vsyncadd [#allocation15], %s343
          %s345 = sshll.u32 [#allocation16], 4
          %s346 = int_to_ptr.vmem [resolvable:$true] %s345
          %351 = dma.hbm_to_vmem [thread:$0]  %s4, 512, %s346, [#allocation15], 128, 128, 8
        $region24: #{tpu_custom_call.1} parent=11 // pred_fallthru
          _
        // Predicated region
        $region25: #{tpu_custom_call.1} parent=11 // pred_check
          %p352 = pneg %p188
        $region26: #{tpu_custom_call.1} parent=11 // pred_check_branch
          %354 = sbr.rel (%p352) target = $region28
        $region27: #{tpu_custom_call.1} parent=11 // pred_region
          %s356 = ssub.s32 16, 16
          %357 = vsyncadd [#allocation18], %s356
          %s359 = sshll.u32 [#allocation17], 4
          %s360 = int_to_ptr.vmem [resolvable:$true] %s359
          %362 = dma.hbm_to_vmem [thread:$0]  %s5, 16, %s360, [#allocation18]
        $region28: #{tpu_custom_call.1} parent=11 // pred_fallthru
          _
        // Predicated region
        $region29: #{tpu_custom_call.1} parent=11 // pred_check
          %p363 = pneg %p209
        $region30: #{tpu_custom_call.1} parent=11 // pred_check_branch
          %365 = sbr.rel (%p363) target = $region32
        $region31: #{tpu_custom_call.1} parent=11 // pred_region
          %s367 = ssub.s32 512, 512
          %368 = vsyncadd [#allocation18], %s367
          %s369 = sshll.u32 [#allocation19], 4
          %s370 = int_to_ptr.vmem [resolvable:$true] %s369
          %375 = dma.hbm_to_vmem [thread:$0]  %s6, 512, %s370, [#allocation18], 128, 128, 8
        $region32: #{tpu_custom_call.1} parent=11 // pred_fallthru
          _
        // Predicated region
        $region33: #{tpu_custom_call.1} parent=11 // pred_check
          %p376 = pneg %p230
        $region34: #{tpu_custom_call.1} parent=11 // pred_check_branch
          %378 = sbr.rel (%p376) target = $region36
        $region35: #{tpu_custom_call.1} parent=11 // pred_region
          %s380 = ssub.s32 16, 16
          %381 = vsyncadd [#allocation21], %s380
          %s383 = sshll.u32 [#allocation20], 4
          %s384 = int_to_ptr.vmem [resolvable:$true] %s383
          %386 = dma.hbm_to_vmem [thread:$0]  %s7, 16, %s384, [#allocation21]
        $region36: #{tpu_custom_call.1} parent=11 // pred_fallthru
          _
        // Predicated region
        $region37: #{tpu_custom_call.1} parent=11 // pred_check
          %p387 = pneg %p251
        $region38: #{tpu_custom_call.1} parent=11 // pred_check_branch
          %389 = sbr.rel (%p387) target = $region40
        $region39: #{tpu_custom_call.1} parent=11 // pred_region
          %s391 = ssub.s32 512, 512
          %392 = vsyncadd [#allocation21], %s391
          %s393 = sshll.u32 [#allocation22], 4
          %s394 = int_to_ptr.vmem [resolvable:$true] %s393
          %399 = dma.hbm_to_vmem [thread:$0]  %s8, 512, %s394, [#allocation21], 128, 128, 8
        $region40: #{tpu_custom_call.1} parent=11 // pred_fallthru
          _
        // Predicated region
        $region41: #{tpu_custom_call.1} parent=11 // pred_check
          %p400 = pneg %p272
        $region42: #{tpu_custom_call.1} parent=11 // pred_check_branch
          %402 = sbr.rel (%p400) target = $region44
        $region43: #{tpu_custom_call.1} parent=11 // pred_region
          %s404 = ssub.s32 16, 16
          %405 = vsyncadd [#allocation24], %s404
          %s407 = sshll.u32 [#allocation23], 4
          %s408 = int_to_ptr.vmem [resolvable:$true] %s407
          %410 = dma.hbm_to_vmem [thread:$0]  %s9, 16, %s408, [#allocation24]
        $region44: #{tpu_custom_call.1} parent=11 // pred_fallthru
          _
      $region12: #{tpu_custom_call.1} parent=5 // pred_fallthru
        _
      %p411 = scmp.lt.s32.totalorder %s29, 8
      // Predicated region
      $region45: #{tpu_custom_call.1} parent=5 // pred_check
        %p412 = pneg %p411
      $region46: #{tpu_custom_call.1} parent=5 // pred_check_branch
        %414 = sbr.rel (%p412) target = $region48
      $region47: #{tpu_custom_call.1} parent=5 // pred_region
        // Predicated region
        $region49: #{tpu_custom_call.1} parent=47 // pred_check
          %p415 = pneg %p70
        $region50: #{tpu_custom_call.1} parent=47 // pred_check_branch
          %417 = sbr.rel (%p415) target = $region52
        $region51: #{tpu_custom_call.1} parent=47 // pred_region
          %s418 = sand.u32 %s60, 1
          %s419 = scalar_lea.sflag [#allocation9], %s418
          %s420 = sand.u32 %s60, 1
          %s421 = smul.addr %s420, 8
          %s422 = scalar_lea.vmem [#allocation8], %s421
          %s424 = ssub.s32 128, 128
          %425 = vsyncadd %s419, %s424
          %s426 = smul.addr %s36, 2
          %s427 = sadd.s32 %s37, %s426
          %s428 = smul.addr %s427, 128
          %s429 = scalar_lea.hbm %s0, %s428
          %s431 = sshll.u32 %s422, 4
          %s432 = int_to_ptr.vmem [resolvable:$true] %s431
          %434 = dma.hbm_to_vmem [thread:$0]  %s429, 128, %s432, %s419
        $region52: #{tpu_custom_call.1} parent=47 // pred_fallthru
          _
        // Predicated region
        $region53: #{tpu_custom_call.1} parent=47 // pred_check
          %p435 = pneg %p98
        $region54: #{tpu_custom_call.1} parent=47 // pred_check_branch
          %437 = sbr.rel (%p435) target = $region56
        $region55: #{tpu_custom_call.1} parent=47 // pred_region
          %s438 = sand.u32 %s29, 1
          %s439 = scalar_lea.sflag [#allocation12], %s438
          %s440 = sand.u32 %s88, 1
          %s441 = smul.addr %s440, 8
          %s442 = scalar_lea.vmem [#allocation11], %s441
          %s444 = ssub.s32 128, 128
          %445 = vsyncadd %s439, %s444
          %s446 = smul.addr %s36, 2
          %s447 = sadd.s32 %s38, %s446
          %s448 = smul.addr %s447, 128
          %s449 = scalar_lea.hbm %s1, %s448
          %s451 = sshll.u32 %s442, 4
          %s452 = int_to_ptr.vmem [resolvable:$true] %s451
          %454 = dma.hbm_to_vmem [thread:$0]  %s449, 128, %s452, %s439
        $region56: #{tpu_custom_call.1} parent=47 // pred_fallthru
          _
      $region48: #{tpu_custom_call.1} parent=5 // pred_fallthru
        _
      %p455 = scmp.le.s32.totalorder 1, %s29
      %p456 = scmp.lt.s32.totalorder %s29, 9
      %p457 = pnand %p455, %p456
      %p458 = pneg %p457
      // Predicated region
      $region57: #{tpu_custom_call.1} parent=5 // pred_check
        _
      $region58: #{tpu_custom_call.1} parent=5 // pred_check_branch
        %460 = sbr.rel (%p457) target = $region60
      $region59: #{tpu_custom_call.1} parent=5 // pred_region
        %s461 = ssub.s32 %s29, 1
        %s462 = sand.u32 %s63, 1
        %s463 = scalar_lea.sflag [#allocation9], %s462
        %s464 = sand.u32 %s63, 1
        %s465 = smul.addr %s464, 8
        %s466 = scalar_lea.vmem [#allocation8], %s465
        // Predicated region
        $region61: #{tpu_custom_call.1} parent=59 // pred_check
          %p467 = pneg %p76
        $region62: #{tpu_custom_call.1} parent=59 // pred_check_branch
          %469 = sbr.rel (%p467) target = $region64
        $region63: #{tpu_custom_call.1} parent=59 // pred_region
          %470 = dma.done %s463, 128
        $region64: #{tpu_custom_call.1} parent=59 // pred_fallthru
          _
        %s471 = sand.u32 %s34, 1
        %s472 = scalar_lea.sflag [#allocation12], %s471
        %s473 = sand.u32 %s91, 1
        %s474 = smul.addr %s473, 8
        %s475 = scalar_lea.vmem [#allocation11], %s474
        // Predicated region
        $region65: #{tpu_custom_call.1} parent=59 // pred_check
          %p476 = pneg %p104
        $region66: #{tpu_custom_call.1} parent=59 // pred_check_branch
          %478 = sbr.rel (%p476) target = $region68
        $region67: #{tpu_custom_call.1} parent=59 // pred_region
          %479 = dma.done %s472, 128
        $region68: #{tpu_custom_call.1} parent=59 // pred_fallthru
          _
        // Predicated region
        $region69: #{tpu_custom_call.1} parent=59 // pred_check
          %p480 = pneg %p125
        $region70: #{tpu_custom_call.1} parent=59 // pred_check_branch
          %482 = sbr.rel (%p480) target = $region72
        $region71: #{tpu_custom_call.1} parent=59 // pred_region
          %483 = dma.done [#allocation12], 512
        $region72: #{tpu_custom_call.1} parent=59 // pred_fallthru
          _
        // Predicated region
        $region73: #{tpu_custom_call.1} parent=59 // pred_check
          %p484 = pneg %p146
        $region74: #{tpu_custom_call.1} parent=59 // pred_check_branch
          %486 = sbr.rel (%p484) target = $region76
        $region75: #{tpu_custom_call.1} parent=59 // pred_region
          %487 = dma.done [#allocation15], 16
        $region76: #{tpu_custom_call.1} parent=59 // pred_fallthru
          _
        // Predicated region
        $region77: #{tpu_custom_call.1} parent=59 // pred_check
          %p488 = pneg %p167
        $region78: #{tpu_custom_call.1} parent=59 // pred_check_branch
          %490 = sbr.rel (%p488) target = $region80
        $region79: #{tpu_custom_call.1} parent=59 // pred_region
          %491 = dma.done [#allocation15], 512
        $region80: #{tpu_custom_call.1} parent=59 // pred_fallthru
          _
        // Predicated region
        $region81: #{tpu_custom_call.1} parent=59 // pred_check
          %p492 = pneg %p188
        $region82: #{tpu_custom_call.1} parent=59 // pred_check_branch
          %494 = sbr.rel (%p492) target = $region84
        $region83: #{tpu_custom_call.1} parent=59 // pred_region
          %495 = dma.done [#allocation18], 16
        $region84: #{tpu_custom_call.1} parent=59 // pred_fallthru
          _
        // Predicated region
        $region85: #{tpu_custom_call.1} parent=59 // pred_check
          %p496 = pneg %p209
        $region86: #{tpu_custom_call.1} parent=59 // pred_check_branch
          %498 = sbr.rel (%p496) target = $region88
        $region87: #{tpu_custom_call.1} parent=59 // pred_region
          %499 = dma.done [#allocation18], 512
        $region88: #{tpu_custom_call.1} parent=59 // pred_fallthru
          _
        // Predicated region
        $region89: #{tpu_custom_call.1} parent=59 // pred_check
          %p500 = pneg %p230
        $region90: #{tpu_custom_call.1} parent=59 // pred_check_branch
          %502 = sbr.rel (%p500) target = $region92
        $region91: #{tpu_custom_call.1} parent=59 // pred_region
          %503 = dma.done [#allocation21], 16
        $region92: #{tpu_custom_call.1} parent=59 // pred_fallthru
          _
        // Predicated region
        $region93: #{tpu_custom_call.1} parent=59 // pred_check
          %p504 = pneg %p251
        $region94: #{tpu_custom_call.1} parent=59 // pred_check_branch
          %506 = sbr.rel (%p504) target = $region96
        $region95: #{tpu_custom_call.1} parent=59 // pred_region
          %507 = dma.done [#allocation21], 512
        $region96: #{tpu_custom_call.1} parent=59 // pred_fallthru
          _
        // Predicated region
        $region97: #{tpu_custom_call.1} parent=59 // pred_check
          %p508 = pneg %p272
        $region98: #{tpu_custom_call.1} parent=59 // pred_check_branch
          %510 = sbr.rel (%p508) target = $region100
        $region99: #{tpu_custom_call.1} parent=59 // pred_region
          %511 = dma.done [#allocation24], 16
        $region100: #{tpu_custom_call.1} parent=59 // pred_fallthru
          _
        %s512 = sand.u32 %s63, 1
        %s513 = scalar_lea.sflag [#allocation9], %s512
        %s514 = sand.u32 %s63, 1
        %s515 = smul.addr %s514, 8
        %s516 = scalar_lea.vmem [#allocation8], %s515
        %p517 = pneg %p76
        %p518 = pneg %p73
        %s519 = sand.u32 %s34, 1
        %s520 = scalar_lea.sflag [#allocation12], %s519
        %s521 = sand.u32 %s91, 1
        %s522 = smul.addr %s521, 8
        %s523 = scalar_lea.vmem [#allocation11], %s522
        %p524 = pneg %p104
        %p525 = pneg %p101
        %p526 = pneg %p125
        %p527 = pneg %p122
        %p528 = pneg %p146
        %p529 = pneg %p143
        %p530 = pneg %p167
        %p531 = pneg %p164
        %p532 = pneg %p188
        %p533 = pneg %p185
        %p534 = pneg %p209
        %p535 = pneg %p206
        %p536 = pneg %p230
        %p537 = pneg %p227
        %p538 = pneg %p251
        %p539 = pneg %p248
        %p540 = pneg %p272
        %p541 = pneg %p269
        %p542 = pneg %p300
        %p543 = pneg %p297
        %s544 = sand.u32 %s287, 1
        %s545 = scalar_lea.sflag [#allocation10], %s544
        %s546 = sand.u32 %s287, 1
        %s547 = smul.addr %s546, 8
        %s548 = scalar_lea.vmem [#allocation25], %s547
        %p549 = scmp.eq.s32.totalorder %s41, 0
        // Predicated region
        $region101: #{tpu_custom_call.1} parent=59 // pred_check
          %p550 = pneg %p549
        $region102: #{tpu_custom_call.1} parent=59 // pred_check_branch
          %552 = sbr.rel (%p550) target = $region104
        $region103: #{tpu_custom_call.1} parent=59 // pred_region
          %vm553 = vcmask 7168
          %554 = vst.msk [vmem:[#allocation5] sm:$0xff] %vm553, -inf
          %555 = vst.msk [vmem:[#allocation5 + $0x8] sm:$0xff] %vm553, -inf
          %556 = vst.msk [vmem:[#allocation5 + $0x10] sm:$0xff] %vm553, -inf
          %557 = vst.msk [vmem:[#allocation5 + $0x18] sm:$0xff] %vm553, -inf
          %558 = vst.msk [vmem:[#allocation6] sm:$0xff] %vm553, 0.0
          %559 = vst.msk [vmem:[#allocation6 + $0x8] sm:$0xff] %vm553, 0.0
          %560 = vst.msk [vmem:[#allocation6 + $0x10] sm:$0xff] %vm553, 0.0
          %561 = vst.msk [vmem:[#allocation6 + $0x18] sm:$0xff] %vm553, 0.0
          %vm562 = vcmask 64512
          %563 = vst.msk [vmem:[#allocation7] sm:$0xff] %vm562, 0.0
          %564 = vst.msk [vmem:[#allocation7 + $0x8] sm:$0xff] %vm562, 0.0
          %565 = vst.msk [vmem:[#allocation7 + $0x10] sm:$0xff] %vm562, 0.0
          %566 = vst.msk [vmem:[#allocation7 + $0x18] sm:$0xff] %vm562, 0.0
          %v567 = vld [vmem:[%s466] sm:$0xff]
          %v568 = vld [vmem:[#allocation13] sm:$0xff]
          %v569 = vld [vmem:[#allocation13 + $0x8] sm:$0xff]
          %v570 = vld [vmem:[#allocation13 + $0x10] sm:$0xff]
          %v571 = vld [vmem:[#allocation13 + $0x18] sm:$0xff]
          %v572 = vld [vmem:[#allocation14] sm:$0x1]
          %v574 = vlaneseq
          %v575 = vshrl.u32 %v574, 7
          %v576 = vsub.s32 0, %v575
          %v577 = vrot.slane %v572, %v576
          %vm579 = vcmask 261120
          %v581 = vsel %vm579, %v567, 0
          %583 = vmatprep.subr.mxu0 0.0
          %584 = vmatpush1.msra.mxu0 %v568
          %585 = vmatprep.subr.mxu0 0.0
          %586 = vmatpush1.msra.mxu0 %v569
          %587 = vmatprep.subr.mxu0 0.0
          %588 = vmatpush1.msra.mxu0 %v570
          %589 = vmatprep.subr.mxu0 0.0
          %590 = vmatpush1.msra.mxu0 %v571
          %591 = vmatprep.subr.mxu0 0.0
          %592 = vmatpush1.msra.mxu0 0.0
          %593 = vmatprep.subr.mxu0 0.0
          %594 = vmatpush1.msra.mxu0 0.0
          %595 = vmatprep.subr.mxu0 0.0
          %596 = vmatpush1.msra.mxu0 0.0
          %597 = vmatprep.subr.mxu0 0.0
          %598 = vmatpush1.msra.mxu0 0.0
          %599 = vmatprep.subr.mxu0 0.0
          %600 = vmatpush1.msra.mxu0 0.0
          %601 = vmatprep.subr.mxu0 0.0
          %602 = vmatpush1.msra.mxu0 0.0
          %603 = vmatprep.subr.mxu0 0.0
          %604 = vmatpush1.msra.mxu0 0.0
          %605 = vmatprep.subr.mxu0 0.0
          %606 = vmatpush1.msra.mxu0 0.0
          %607 = vmatprep.subr.mxu0 0.0
          %608 = vmatpush1.msra.mxu0 0.0
          %609 = vmatprep.subr.mxu0 0.0
          %610 = vmatpush1.msra.mxu0 0.0
          %611 = vmatprep.subr.mxu0 0.0
          %612 = vmatpush1.msra.mxu0 0.0
          %613 = vmatprep.subr.mxu0 0.0
          %614 = vmatpush1.msra.mxu0 0.0
          %615 = vmatprep.subr.mxu0 0.0
          %616 = vmatpush1.msra.mxu0 0.0
          %617 = vmatprep.subr.mxu0 0.0
          %618 = vmatpush1.msra.mxu0 0.0
          %619 = vmatprep.subr.mxu0 0.0
          %620 = vmatpush1.msra.mxu0 0.0
          %621 = vmatprep.subr.mxu0 0.0
          %622 = vmatpush1.msra.mxu0 0.0
          %623 = vmatprep.subr.mxu0 0.0
          %624 = vmatpush1.msra.mxu0 0.0
          %625 = vmatprep.subr.mxu0 0.0
          %626 = vmatpush1.msra.mxu0 0.0
          %627 = vmatprep.subr.mxu0 0.0
          %628 = vmatpush1.msra.mxu0 0.0
          %629 = vmatprep.subr.mxu0 0.0
          %630 = vmatpush1.msra.mxu0 0.0
          %631 = vmatprep.subr.mxu0 0.0
          %632 = vmatpush1.msra.mxu0 0.0
          %633 = vmatprep.subr.mxu0 0.0
          %634 = vmatpush1.msra.mxu0 0.0
          %635 = vmatprep.subr.mxu0 0.0
          %636 = vmatpush1.msra.mxu0 0.0
          %637 = vmatprep.subr.mxu0 0.0
          %638 = vmatpush1.msra.mxu0 0.0
          %639 = vmatprep.subr.mxu0 0.0
          %640 = vmatpush1.msra.mxu0 0.0
          %641 = vmatprep.subr.mxu0 0.0
          %642 = vmatpush1.msra.mxu0 0.0
          %643 = vmatprep.subr.mxu0 0.0
          %644 = vmatpush1.msra.mxu0 0.0
          %645 = vmatprep.subr.mxu0 0.0
          %646 = vmatpush1.msra.mxu0 0.0
          %647 = vmatprep.mubr.f32.mxu0 0.0
          %648 = vmatmul.mubr.f32.gmra.mrb[0].mxu0 %v581
          %v649 = vpop.f32.mrb[0].mxu0
          %v650 = vadd.f32 %v577, %v649
          %v651 = vpop.f32.mrb[0].mxu0
          %652 = vdwg.mxu0
          %v653 = vmul.f32 %v650, 0.35355338
          %654 = vst.msk [vmem:[#allocation2] sm:$0xff] %vm562, %v653
          %656 = vrot.lane.b32.xlu0 %v653, 120
          %v657 = vpop.permute.xlu0 %656
          %s659 = scalar_lea.vmem [#allocation2], 8
          %660 = vst.msk [vmem:[%s659] sm:$0xff] %vm562, %v657
          %661 = vrot.lane.b32.xlu0 %v653, 112
          %v662 = vpop.permute.xlu0 %661
          %s664 = scalar_lea.vmem [#allocation2], 16
          %665 = vst.msk [vmem:[%s664] sm:$0xff] %vm562, %v662
          %666 = vrot.lane.b32.xlu0 %v653, 104
          %v667 = vpop.permute.xlu0 %666
          %s669 = scalar_lea.vmem [#allocation2], 24
          %670 = vst.msk [vmem:[%s669] sm:$0xff] %vm562, %v667
        $region104: #{tpu_custom_call.1} parent=59 // pred_fallthru
          _
        %v671 = vld [vmem:[%s475] sm:$0xff]
        %v672 = vld [vmem:[#allocation16] sm:$0xff]
        %v673 = vld [vmem:[#allocation16 + $0x8] sm:$0xff]
        %v674 = vld [vmem:[#allocation16 + $0x10] sm:$0xff]
        %v675 = vld [vmem:[#allocation16 + $0x18] sm:$0xff]
        %v676 = vld [vmem:[#allocation17] sm:$0x1]
        %v678 = vlaneseq
        %v679 = vshrl.u32 %v678, 7
        %v680 = vsub.s32 0, %v679
        %v681 = vrot.slane %v676, %v680
        %vm683 = vcmask 261120
        %v685 = vsel %vm683, %v671, 0
        %687 = vmatprep.subr.mxu0 0.0
        %688 = vmatpush1.msra.mxu0 %v672
        %689 = vmatprep.subr.mxu0 0.0
        %690 = vmatpush1.msra.mxu0 %v673
        %691 = vmatprep.subr.mxu0 0.0
        %692 = vmatpush1.msra.mxu0 %v674
        %693 = vmatprep.subr.mxu0 0.0
        %694 = vmatpush1.msra.mxu0 %v675
        %695 = vmatprep.subr.mxu0 0.0
        %696 = vmatpush1.msra.mxu0 0.0
        %697 = vmatprep.subr.mxu0 0.0
        %698 = vmatpush1.msra.mxu0 0.0
        %699 = vmatprep.subr.mxu0 0.0
        %700 = vmatpush1.msra.mxu0 0.0
        %701 = vmatprep.subr.mxu0 0.0
        %702 = vmatpush1.msra.mxu0 0.0
        %703 = vmatprep.subr.mxu0 0.0
        %704 = vmatpush1.msra.mxu0 0.0
        %705 = vmatprep.subr.mxu0 0.0
        %706 = vmatpush1.msra.mxu0 0.0
        %707 = vmatprep.subr.mxu0 0.0
        %708 = vmatpush1.msra.mxu0 0.0
        %709 = vmatprep.subr.mxu0 0.0
        %710 = vmatpush1.msra.mxu0 0.0
        %711 = vmatprep.subr.mxu0 0.0
        %712 = vmatpush1.msra.mxu0 0.0
        %713 = vmatprep.subr.mxu0 0.0
        %714 = vmatpush1.msra.mxu0 0.0
        %715 = vmatprep.subr.mxu0 0.0
        %716 = vmatpush1.msra.mxu0 0.0
        %717 = vmatprep.subr.mxu0 0.0
        %718 = vmatpush1.msra.mxu0 0.0
        %719 = vmatprep.subr.mxu0 0.0
        %720 = vmatpush1.msra.mxu0 0.0
        %721 = vmatprep.subr.mxu0 0.0
        %722 = vmatpush1.msra.mxu0 0.0
        %723 = vmatprep.subr.mxu0 0.0
        %724 = vmatpush1.msra.mxu0 0.0
        %725 = vmatprep.subr.mxu0 0.0
        %726 = vmatpush1.msra.mxu0 0.0
        %727 = vmatprep.subr.mxu0 0.0
        %728 = vmatpush1.msra.mxu0 0.0
        %729 = vmatprep.subr.mxu0 0.0
        %730 = vmatpush1.msra.mxu0 0.0
        %731 = vmatprep.subr.mxu0 0.0
        %732 = vmatpush1.msra.mxu0 0.0
        %733 = vmatprep.subr.mxu0 0.0
        %734 = vmatpush1.msra.mxu0 0.0
        %735 = vmatprep.subr.mxu0 0.0
        %736 = vmatpush1.msra.mxu0 0.0
        %737 = vmatprep.subr.mxu0 0.0
        %738 = vmatpush1.msra.mxu0 0.0
        %739 = vmatprep.subr.mxu0 0.0
        %740 = vmatpush1.msra.mxu0 0.0
        %741 = vmatprep.subr.mxu0 0.0
        %742 = vmatpush1.msra.mxu0 0.0
        %743 = vmatprep.subr.mxu0 0.0
        %744 = vmatpush1.msra.mxu0 0.0
        %745 = vmatprep.subr.mxu0 0.0
        %746 = vmatpush1.msra.mxu0 0.0
        %747 = vmatprep.subr.mxu0 0.0
        %748 = vmatpush1.msra.mxu0 0.0
        %749 = vmatprep.subr.mxu0 0.0
        %750 = vmatpush1.msra.mxu0 0.0
        %751 = vmatprep.mubr.f32.mxu0 0.0
        %752 = vmatmul.mubr.f32.gmra.mrb[0].mxu0 %v685
        %v753 = vpop.f32.mrb[0].mxu0
        %v754 = vadd.f32 %v681, %v753
        %v755 = vpop.f32.mrb[0].mxu0
        %756 = vdwg.mxu0
        %v757 = vld [vmem:[#allocation19] sm:$0xff]
        %v758 = vld [vmem:[#allocation19 + $0x8] sm:$0xff]
        %v759 = vld [vmem:[#allocation19 + $0x10] sm:$0xff]
        %v760 = vld [vmem:[#allocation19 + $0x18] sm:$0xff]
        %v761 = vld [vmem:[#allocation20] sm:$0x1]
        %v763 = vlaneseq
        %v764 = vshrl.u32 %v763, 7
        %v765 = vsub.s32 0, %v764
        %v766 = vrot.slane %v761, %v765
        %768 = vmatprep.subr.mxu0 0.0
        %769 = vmatpush1.msra.mxu0 %v757
        %770 = vmatprep.subr.mxu0 0.0
        %771 = vmatpush1.msra.mxu0 %v758
        %772 = vmatprep.subr.mxu0 0.0
        %773 = vmatpush1.msra.mxu0 %v759
        %774 = vmatprep.subr.mxu0 0.0
        %775 = vmatpush1.msra.mxu0 %v760
        %776 = vmatprep.subr.mxu0 0.0
        %777 = vmatpush1.msra.mxu0 0.0
        %778 = vmatprep.subr.mxu0 0.0
        %779 = vmatpush1.msra.mxu0 0.0
        %780 = vmatprep.subr.mxu0 0.0
        %781 = vmatpush1.msra.mxu0 0.0
        %782 = vmatprep.subr.mxu0 0.0
        %783 = vmatpush1.msra.mxu0 0.0
        %784 = vmatprep.subr.mxu0 0.0
        %785 = vmatpush1.msra.mxu0 0.0
        %786 = vmatprep.subr.mxu0 0.0
        %787 = vmatpush1.msra.mxu0 0.0
        %788 = vmatprep.subr.mxu0 0.0
        %789 = vmatpush1.msra.mxu0 0.0
        %790 = vmatprep.subr.mxu0 0.0
        %791 = vmatpush1.msra.mxu0 0.0
        %792 = vmatprep.subr.mxu0 0.0
        %793 = vmatpush1.msra.mxu0 0.0
        %794 = vmatprep.subr.mxu0 0.0
        %795 = vmatpush1.msra.mxu0 0.0
        %796 = vmatprep.subr.mxu0 0.0
        %797 = vmatpush1.msra.mxu0 0.0
        %798 = vmatprep.subr.mxu0 0.0
        %799 = vmatpush1.msra.mxu0 0.0
        %800 = vmatprep.subr.mxu0 0.0
        %801 = vmatpush1.msra.mxu0 0.0
        %802 = vmatprep.subr.mxu0 0.0
        %803 = vmatpush1.msra.mxu0 0.0
        %804 = vmatprep.subr.mxu0 0.0
        %805 = vmatpush1.msra.mxu0 0.0
        %806 = vmatprep.subr.mxu0 0.0
        %807 = vmatpush1.msra.mxu0 0.0
        %808 = vmatprep.subr.mxu0 0.0
        %809 = vmatpush1.msra.mxu0 0.0
        %810 = vmatprep.subr.mxu0 0.0
        %811 = vmatpush1.msra.mxu0 0.0
        %812 = vmatprep.subr.mxu0 0.0
        %813 = vmatpush1.msra.mxu0 0.0
        %814 = vmatprep.subr.mxu0 0.0
        %815 = vmatpush1.msra.mxu0 0.0
        %816 = vmatprep.subr.mxu0 0.0
        %817 = vmatpush1.msra.mxu0 0.0
        %818 = vmatprep.subr.mxu0 0.0
        %819 = vmatpush1.msra.mxu0 0.0
        %820 = vmatprep.subr.mxu0 0.0
        %821 = vmatpush1.msra.mxu0 0.0
        %822 = vmatprep.subr.mxu0 0.0
        %823 = vmatpush1.msra.mxu0 0.0
        %824 = vmatprep.subr.mxu0 0.0
        %825 = vmatpush1.msra.mxu0 0.0
        %826 = vmatprep.subr.mxu0 0.0
        %827 = vmatpush1.msra.mxu0 0.0
        %828 = vmatprep.subr.mxu0 0.0
        %829 = vmatpush1.msra.mxu0 0.0
        %830 = vmatprep.subr.mxu0 0.0
        %831 = vmatpush1.msra.mxu0 0.0
        %832 = vmatprep.mubr.f32.mxu0 0.0
        %833 = vmatmul.mubr.f32.gmra.mrb[0].mxu0 %v685
        %v834 = vpop.f32.mrb[0].mxu0
        %v835 = vadd.f32 %v766, %v834
        %v836 = vpop.f32.mrb[0].mxu0
        %837 = vdwg.mxu0
        %vm838 = vcmask 64512
        %839 = vst.msk [vmem:[#allocation3] sm:$0xff] %vm838, %v754
        %840 = vst.msk [vmem:[#allocation4] sm:$0xff] %vm838, %v835
        %842 = vrot.lane.b32.xlu0 %v754, 120
        %v843 = vpop.permute.xlu0 %842
        %s845 = scalar_lea.vmem [#allocation3], 8
        %846 = vst.msk [vmem:[%s845] sm:$0xff] %vm838, %v843
        %848 = vrot.lane.b32.xlu0 %v835, 120
        %v849 = vpop.permute.xlu0 %848
        %s851 = scalar_lea.vmem [#allocation4], 8
        %852 = vst.msk [vmem:[%s851] sm:$0xff] %vm838, %v849
        %853 = vrot.lane.b32.xlu0 %v754, 112
        %v854 = vpop.permute.xlu0 %853
        %s856 = scalar_lea.vmem [#allocation3], 16
        %857 = vst.msk [vmem:[%s856] sm:$0xff] %vm838, %v854
        %858 = vrot.lane.b32.xlu0 %v835, 112
        %v859 = vpop.permute.xlu0 %858
        %s861 = scalar_lea.vmem [#allocation4], 16
        %862 = vst.msk [vmem:[%s861] sm:$0xff] %vm838, %v859
        %863 = vrot.lane.b32.xlu0 %v754, 104
        %v864 = vpop.permute.xlu0 %863
        %s866 = scalar_lea.vmem [#allocation3], 24
        %867 = vst.msk [vmem:[%s866] sm:$0xff] %vm838, %v864
        %868 = vrot.lane.b32.xlu0 %v835, 104
        %v869 = vpop.permute.xlu0 %868
        %s871 = scalar_lea.vmem [#allocation4], 24
        %872 = vst.msk [vmem:[%s871] sm:$0xff] %vm838, %v869
        %v873 = vld [vmem:[#allocation2] sm:$0xff]
        %v874 = vld [vmem:[#allocation2 + $0x8] sm:$0xff]
        %v875 = vld [vmem:[#allocation2 + $0x10] sm:$0xff]
        %v876 = vld [vmem:[#allocation2 + $0x18] sm:$0xff]
        %v877 = vld [vmem:[#allocation3] sm:$0xff]
        %v878 = vld [vmem:[#allocation3 + $0x8] sm:$0xff]
        %v879 = vld [vmem:[#allocation3 + $0x10] sm:$0xff]
        %v880 = vld [vmem:[#allocation3 + $0x18] sm:$0xff]
        %v882 = vsel %vm838, %v873, 0
        %v885 = vsel %vm838, %v877, 0
        %887 = vmatprep.subr.mxu0 0.0
        %888 = vmatpush1.xpose.msra.mxu0 %v885
        %889 = vmatprep.subr.mxu0 0.0
        %890 = vmatpush1.xpose.msra.mxu0 0.0
        %891 = vmatprep.subr.mxu0 0.0
        %892 = vmatpush1.xpose.msra.mxu0 0.0
        %893 = vmatprep.subr.mxu0 0.0
        %894 = vmatpush1.xpose.msra.mxu0 0.0
        %895 = vmatprep.subr.mxu0 0.0
        %896 = vmatpush1.xpose.msra.mxu0 0.0
        %897 = vmatprep.subr.mxu0 0.0
        %898 = vmatpush1.xpose.msra.mxu0 0.0
        %899 = vmatprep.subr.mxu0 0.0
        %900 = vmatpush1.xpose.msra.mxu0 0.0
        %901 = vmatprep.subr.mxu0 0.0
        %902 = vmatpush1.xpose.msra.mxu0 0.0
        %903 = vmatprep.subr.mxu0 0.0
        %904 = vmatpush1.xpose.msra.mxu0 0.0
        %905 = vmatprep.subr.mxu0 0.0
        %906 = vmatpush1.xpose.msra.mxu0 0.0
        %907 = vmatprep.subr.mxu0 0.0
        %908 = vmatpush1.xpose.msra.mxu0 0.0
        %909 = vmatprep.subr.mxu0 0.0
        %910 = vmatpush1.xpose.msra.mxu0 0.0
        %911 = vmatprep.subr.mxu0 0.0
        %912 = vmatpush1.xpose.msra.mxu0 0.0
        %913 = vmatprep.subr.mxu0 0.0
        %914 = vmatpush1.xpose.msra.mxu0 0.0
        %915 = vmatprep.subr.mxu0 0.0
        %916 = vmatpush1.xpose.msra.mxu0 0.0
        %917 = vmatprep.subr.mxu0 0.0
        %918 = vmatpush1.xpose.msra.mxu0 0.0
        %919 = vmatprep.subr.mxu0 0.0
        %920 = vmatpush1.xpose.msra.mxu0 0.0
        %921 = vmatprep.subr.mxu0 0.0
        %922 = vmatpush1.xpose.msra.mxu0 0.0
        %923 = vmatprep.subr.mxu0 0.0
        %924 = vmatpush1.xpose.msra.mxu0 0.0
        %925 = vmatprep.subr.mxu0 0.0
        %926 = vmatpush1.xpose.msra.mxu0 0.0
        %927 = vmatprep.subr.mxu0 0.0
        %928 = vmatpush1.xpose.msra.mxu0 0.0
        %929 = vmatprep.subr.mxu0 0.0
        %930 = vmatpush1.xpose.msra.mxu0 0.0
        %931 = vmatprep.subr.mxu0 0.0
        %932 = vmatpush1.xpose.msra.mxu0 0.0
        %933 = vmatprep.subr.mxu0 0.0
        %934 = vmatpush1.xpose.msra.mxu0 0.0
        %935 = vmatprep.subr.mxu0 0.0
        %936 = vmatpush1.xpose.msra.mxu0 0.0
        %937 = vmatprep.subr.mxu0 0.0
        %938 = vmatpush1.xpose.msra.mxu0 0.0
        %939 = vmatprep.subr.mxu0 0.0
        %940 = vmatpush1.xpose.msra.mxu0 0.0
        %941 = vmatprep.subr.mxu0 0.0
        %942 = vmatpush1.xpose.msra.mxu0 0.0
        %943 = vmatprep.subr.mxu0 0.0
        %944 = vmatpush1.xpose.msra.mxu0 0.0
        %945 = vmatprep.subr.mxu0 0.0
        %946 = vmatpush1.xpose.msra.mxu0 0.0
        %947 = vmatprep.subr.mxu0 0.0
        %948 = vmatpush1.xpose.msra.mxu0 0.0
        %949 = vmatprep.subr.mxu0 0.0
        %950 = vmatpush1.xpose.msra.mxu0 0.0
        %951 = vmatprep.mubr.f32.mxu0 0.0
        %952 = vmatmul.mubr.f32.gmra.mrb[0].mxu0 %v882
        %v953 = vpop.f32.mrb[0].mxu0
        %v954 = vadd.f32 0.0, %v953
        %v955 = vpop.f32.mrb[0].mxu0
        %956 = vdwg.mxu0
        %v958 = vsel %vm838, %v874, 0
        %v961 = vsel %vm838, %v878, 0
        %963 = vmatprep.subr.mxu0 0.0
        %964 = vmatpush1.xpose.msra.mxu0 %v961
        %965 = vmatprep.subr.mxu0 0.0
        %966 = vmatpush1.xpose.msra.mxu0 0.0
        %967 = vmatprep.subr.mxu0 0.0
        %968 = vmatpush1.xpose.msra.mxu0 0.0
        %969 = vmatprep.subr.mxu0 0.0
        %970 = vmatpush1.xpose.msra.mxu0 0.0
        %971 = vmatprep.subr.mxu0 0.0
        %972 = vmatpush1.xpose.msra.mxu0 0.0
        %973 = vmatprep.subr.mxu0 0.0
        %974 = vmatpush1.xpose.msra.mxu0 0.0
        %975 = vmatprep.subr.mxu0 0.0
        %976 = vmatpush1.xpose.msra.mxu0 0.0
        %977 = vmatprep.subr.mxu0 0.0
        %978 = vmatpush1.xpose.msra.mxu0 0.0
        %979 = vmatprep.subr.mxu0 0.0
        %980 = vmatpush1.xpose.msra.mxu0 0.0
        %981 = vmatprep.subr.mxu0 0.0
        %982 = vmatpush1.xpose.msra.mxu0 0.0
        %983 = vmatprep.subr.mxu0 0.0
        %984 = vmatpush1.xpose.msra.mxu0 0.0
        %985 = vmatprep.subr.mxu0 0.0
        %986 = vmatpush1.xpose.msra.mxu0 0.0
        %987 = vmatprep.subr.mxu0 0.0
        %988 = vmatpush1.xpose.msra.mxu0 0.0
        %989 = vmatprep.subr.mxu0 0.0
        %990 = vmatpush1.xpose.msra.mxu0 0.0
        %991 = vmatprep.subr.mxu0 0.0
        %992 = vmatpush1.xpose.msra.mxu0 0.0
        %993 = vmatprep.subr.mxu0 0.0
        %994 = vmatpush1.xpose.msra.mxu0 0.0
        %995 = vmatprep.subr.mxu0 0.0
        %996 = vmatpush1.xpose.msra.mxu0 0.0
        %997 = vmatprep.subr.mxu0 0.0
        %998 = vmatpush1.xpose.msra.mxu0 0.0
        %999 = vmatprep.subr.mxu0 0.0
        %1000 = vmatpush1.xpose.msra.mxu0 0.0
        %1001 = vmatprep.subr.mxu0 0.0
        %1002 = vmatpush1.xpose.msra.mxu0 0.0
        %1003 = vmatprep.subr.mxu0 0.0
        %1004 = vmatpush1.xpose.msra.mxu0 0.0
        %1005 = vmatprep.subr.mxu0 0.0
        %1006 = vmatpush1.xpose.msra.mxu0 0.0
        %1007 = vmatprep.subr.mxu0 0.0
        %1008 = vmatpush1.xpose.msra.mxu0 0.0
        %1009 = vmatprep.subr.mxu0 0.0
        %1010 = vmatpush1.xpose.msra.mxu0 0.0
        %1011 = vmatprep.subr.mxu0 0.0
        %1012 = vmatpush1.xpose.msra.mxu0 0.0
        %1013 = vmatprep.subr.mxu0 0.0
        %1014 = vmatpush1.xpose.msra.mxu0 0.0
        %1015 = vmatprep.subr.mxu0 0.0
        %1016 = vmatpush1.xpose.msra.mxu0 0.0
        %1017 = vmatprep.subr.mxu0 0.0
        %1018 = vmatpush1.xpose.msra.mxu0 0.0
        %1019 = vmatprep.subr.mxu0 0.0
        %1020 = vmatpush1.xpose.msra.mxu0 0.0
        %1021 = vmatprep.subr.mxu0 0.0
        %1022 = vmatpush1.xpose.msra.mxu0 0.0
        %1023 = vmatprep.subr.mxu0 0.0
        %1024 = vmatpush1.xpose.msra.mxu0 0.0
        %1025 = vmatprep.subr.mxu0 0.0
        %1026 = vmatpush1.xpose.msra.mxu0 0.0
        %1027 = vmatprep.mubr.f32.mxu0 0.0
        %1028 = vmatmul.mubr.f32.gmra.mrb[0].mxu0 %v958
        %v1029 = vpop.f32.mrb[0].mxu0
        %v1030 = vadd.f32 0.0, %v1029
        %v1031 = vpop.f32.mrb[0].mxu0
        %1032 = vdwg.mxu0
        %v1034 = vsel %vm838, %v875, 0
        %v1037 = vsel %vm838, %v879, 0
        %1039 = vmatprep.subr.mxu0 0.0
        %1040 = vmatpush1.xpose.msra.mxu0 %v1037
        %1041 = vmatprep.subr.mxu0 0.0
        %1042 = vmatpush1.xpose.msra.mxu0 0.0
        %1043 = vmatprep.subr.mxu0 0.0
        %1044 = vmatpush1.xpose.msra.mxu0 0.0
        %1045 = vmatprep.subr.mxu0 0.0
        %1046 = vmatpush1.xpose.msra.mxu0 0.0
        %1047 = vmatprep.subr.mxu0 0.0
        %1048 = vmatpush1.xpose.msra.mxu0 0.0
        %1049 = vmatprep.subr.mxu0 0.0
        %1050 = vmatpush1.xpose.msra.mxu0 0.0
        %1051 = vmatprep.subr.mxu0 0.0
        %1052 = vmatpush1.xpose.msra.mxu0 0.0
        %1053 = vmatprep.subr.mxu0 0.0
        %1054 = vmatpush1.xpose.msra.mxu0 0.0
        %1055 = vmatprep.subr.mxu0 0.0
        %1056 = vmatpush1.xpose.msra.mxu0 0.0
        %1057 = vmatprep.subr.mxu0 0.0
        %1058 = vmatpush1.xpose.msra.mxu0 0.0
        %1059 = vmatprep.subr.mxu0 0.0
        %1060 = vmatpush1.xpose.msra.mxu0 0.0
        %1061 = vmatprep.subr.mxu0 0.0
        %1062 = vmatpush1.xpose.msra.mxu0 0.0
        %1063 = vmatprep.subr.mxu0 0.0
        %1064 = vmatpush1.xpose.msra.mxu0 0.0
        %1065 = vmatprep.subr.mxu0 0.0
        %1066 = vmatpush1.xpose.msra.mxu0 0.0
        %1067 = vmatprep.subr.mxu0 0.0
        %1068 = vmatpush1.xpose.msra.mxu0 0.0
        %1069 = vmatprep.subr.mxu0 0.0
        %1070 = vmatpush1.xpose.msra.mxu0 0.0
        %1071 = vmatprep.subr.mxu0 0.0
        %1072 = vmatpush1.xpose.msra.mxu0 0.0
        %1073 = vmatprep.subr.mxu0 0.0
        %1074 = vmatpush1.xpose.msra.mxu0 0.0
        %1075 = vmatprep.subr.mxu0 0.0
        %1076 = vmatpush1.xpose.msra.mxu0 0.0
        %1077 = vmatprep.subr.mxu0 0.0
        %1078 = vmatpush1.xpose.msra.mxu0 0.0
        %1079 = vmatprep.subr.mxu0 0.0
        %1080 = vmatpush1.xpose.msra.mxu0 0.0
        %1081 = vmatprep.subr.mxu0 0.0
        %1082 = vmatpush1.xpose.msra.mxu0 0.0
        %1083 = vmatprep.subr.mxu0 0.0
        %1084 = vmatpush1.xpose.msra.mxu0 0.0
        %1085 = vmatprep.subr.mxu0 0.0
        %1086 = vmatpush1.xpose.msra.mxu0 0.0
        %1087 = vmatprep.subr.mxu0 0.0
        %1088 = vmatpush1.xpose.msra.mxu0 0.0
        %1089 = vmatprep.subr.mxu0 0.0
        %1090 = vmatpush1.xpose.msra.mxu0 0.0
        %1091 = vmatprep.subr.mxu0 0.0
        %1092 = vmatpush1.xpose.msra.mxu0 0.0
        %1093 = vmatprep.subr.mxu0 0.0
        %1094 = vmatpush1.xpose.msra.mxu0 0.0
        %1095 = vmatprep.subr.mxu0 0.0
        %1096 = vmatpush1.xpose.msra.mxu0 0.0
        %1097 = vmatprep.subr.mxu0 0.0
        %1098 = vmatpush1.xpose.msra.mxu0 0.0
        %1099 = vmatprep.subr.mxu0 0.0
        %1100 = vmatpush1.xpose.msra.mxu0 0.0
        %1101 = vmatprep.subr.mxu0 0.0
        %1102 = vmatpush1.xpose.msra.mxu0 0.0
        %1103 = vmatprep.mubr.f32.mxu0 0.0
        %1104 = vmatmul.mubr.f32.gmra.mrb[0].mxu0 %v1034
        %v1105 = vpop.f32.mrb[0].mxu0
        %v1106 = vadd.f32 0.0, %v1105
        %v1107 = vpop.f32.mrb[0].mxu0
        %1108 = vdwg.mxu0
        %v1110 = vsel %vm838, %v876, 0
        %v1113 = vsel %vm838, %v880, 0
        %1115 = vmatprep.subr.mxu0 0.0
        %1116 = vmatpush1.xpose.msra.mxu0 %v1113
        %1117 = vmatprep.subr.mxu0 0.0
        %1118 = vmatpush1.xpose.msra.mxu0 0.0
        %1119 = vmatprep.subr.mxu0 0.0
        %1120 = vmatpush1.xpose.msra.mxu0 0.0
        %1121 = vmatprep.subr.mxu0 0.0
        %1122 = vmatpush1.xpose.msra.mxu0 0.0
        %1123 = vmatprep.subr.mxu0 0.0
        %1124 = vmatpush1.xpose.msra.mxu0 0.0
        %1125 = vmatprep.subr.mxu0 0.0
        %1126 = vmatpush1.xpose.msra.mxu0 0.0
        %1127 = vmatprep.subr.mxu0 0.0
        %1128 = vmatpush1.xpose.msra.mxu0 0.0
        %1129 = vmatprep.subr.mxu0 0.0
        %1130 = vmatpush1.xpose.msra.mxu0 0.0
        %1131 = vmatprep.subr.mxu0 0.0
        %1132 = vmatpush1.xpose.msra.mxu0 0.0
        %1133 = vmatprep.subr.mxu0 0.0
        %1134 = vmatpush1.xpose.msra.mxu0 0.0
        %1135 = vmatprep.subr.mxu0 0.0
        %1136 = vmatpush1.xpose.msra.mxu0 0.0
        %1137 = vmatprep.subr.mxu0 0.0
        %1138 = vmatpush1.xpose.msra.mxu0 0.0
        %1139 = vmatprep.subr.mxu0 0.0
        %1140 = vmatpush1.xpose.msra.mxu0 0.0
        %1141 = vmatprep.subr.mxu0 0.0
        %1142 = vmatpush1.xpose.msra.mxu0 0.0
        %1143 = vmatprep.subr.mxu0 0.0
        %1144 = vmatpush1.xpose.msra.mxu0 0.0
        %1145 = vmatprep.subr.mxu0 0.0
        %1146 = vmatpush1.xpose.msra.mxu0 0.0
        %1147 = vmatprep.subr.mxu0 0.0
        %1148 = vmatpush1.xpose.msra.mxu0 0.0
        %1149 = vmatprep.subr.mxu0 0.0
        %1150 = vmatpush1.xpose.msra.mxu0 0.0
        %1151 = vmatprep.subr.mxu0 0.0
        %1152 = vmatpush1.xpose.msra.mxu0 0.0
        %1153 = vmatprep.subr.mxu0 0.0
        %1154 = vmatpush1.xpose.msra.mxu0 0.0
        %1155 = vmatprep.subr.mxu0 0.0
        %1156 = vmatpush1.xpose.msra.mxu0 0.0
        %1157 = vmatprep.subr.mxu0 0.0
        %1158 = vmatpush1.xpose.msra.mxu0 0.0
        %1159 = vmatprep.subr.mxu0 0.0
        %1160 = vmatpush1.xpose.msra.mxu0 0.0
        %1161 = vmatprep.subr.mxu0 0.0
        %1162 = vmatpush1.xpose.msra.mxu0 0.0
        %1163 = vmatprep.subr.mxu0 0.0
        %1164 = vmatpush1.xpose.msra.mxu0 0.0
        %1165 = vmatprep.subr.mxu0 0.0
        %1166 = vmatpush1.xpose.msra.mxu0 0.0
        %1167 = vmatprep.subr.mxu0 0.0
        %1168 = vmatpush1.xpose.msra.mxu0 0.0
        %1169 = vmatprep.subr.mxu0 0.0
        %1170 = vmatpush1.xpose.msra.mxu0 0.0
        %1171 = vmatprep.subr.mxu0 0.0
        %1172 = vmatpush1.xpose.msra.mxu0 0.0
        %1173 = vmatprep.subr.mxu0 0.0
        %1174 = vmatpush1.xpose.msra.mxu0 0.0
        %1175 = vmatprep.subr.mxu0 0.0
        %1176 = vmatpush1.xpose.msra.mxu0 0.0
        %1177 = vmatprep.subr.mxu0 0.0
        %1178 = vmatpush1.xpose.msra.mxu0 0.0
        %1179 = vmatprep.mubr.f32.mxu0 0.0
        %1180 = vmatmul.mubr.f32.gmra.mrb[0].mxu0 %v1110
        %v1181 = vpop.f32.mrb[0].mxu0
        %v1182 = vadd.f32 0.0, %v1181
        %v1183 = vpop.f32.mrb[0].mxu0
        %1184 = vdwg.mxu0
        %v1185 = vld [vmem:[#allocation5] sm:$0xff]
        %v1186 = vld [vmem:[#allocation5 + $0x8] sm:$0xff]
        %v1187 = vld [vmem:[#allocation5 + $0x10] sm:$0xff]
        %v1188 = vld [vmem:[#allocation5 + $0x18] sm:$0xff]
        %v1189 = vsel %vm838, %v954, -inf
        %1190 = vmax.xlane.f32.xlu0 %v1189
        %v1191 = vpop.xlane.xlu0 %1190
        %v1192 = vsel %vm838, %v1030, -inf
        %1193 = vmax.xlane.f32.xlu0 %v1192
        %v1194 = vpop.xlane.xlu0 %1193
        %v1195 = vsel %vm838, %v1106, -inf
        %1196 = vmax.xlane.f32.xlu0 %v1195
        %v1197 = vpop.xlane.xlu0 %1196
        %v1198 = vsel %vm838, %v1182, -inf
        %1199 = vmax.xlane.f32.xlu0 %v1198
        %v1200 = vpop.xlane.xlu0 %1199
        %v1201 = vmax.f32 %v1185, %v1191
        %v1202 = vmax.f32 %v1186, %v1194
        %v1203 = vmax.f32 %v1187, %v1197
        %v1204 = vmax.f32 %v1188, %v1200
        %v1205 = vsub.f32 %v1185, %v1201
        %v1206 = vsub.f32 %v1186, %v1202
        %v1207 = vsub.f32 %v1187, %v1203
        %v1208 = vsub.f32 %v1188, %v1204
        %v1209 = vmul.f32 %v1205, 1.442695
        %v1210 = vpow.pop %v1209
        %v1211 = vmul.f32 %v1206, 1.442695
        %v1212 = vpow.pop %v1211
        %v1213 = vmul.f32 %v1207, 1.442695
        %v1214 = vpow.pop %v1213
        %v1215 = vmul.f32 %v1208, 1.442695
        %v1216 = vpow.pop %v1215
        %1218 = vset.pattern.permute.xlu0 0
        %1219 = vperm.xlu0 %1218, %v1201
        %v1220 = vpop.permute.xlu0 %1219
        %1223 = vset.pattern.permute.xlu0 0
        %1224 = vperm.xlu0 %1223, %v1202
        %v1225 = vpop.permute.xlu0 %1224
        %1228 = vset.pattern.permute.xlu0 0
        %1229 = vperm.xlu0 %1228, %v1203
        %v1230 = vpop.permute.xlu0 %1229
        %1233 = vset.pattern.permute.xlu0 0
        %1234 = vperm.xlu0 %1233, %v1204
        %v1235 = vpop.permute.xlu0 %1234
        %v1237 = vsub.f32 %v954, %v1220
        %v1238 = vsub.f32 %v1030, %v1225
        %v1239 = vsub.f32 %v1106, %v1230
        %v1240 = vsub.f32 %v1182, %v1235
        %v1241 = vmul.f32 %v1237, 1.442695
        %v1242 = vpow.pop %v1241
        %v1243 = vmul.f32 %v1238, 1.442695
        %v1244 = vpow.pop %v1243
        %v1245 = vmul.f32 %v1239, 1.442695
        %v1246 = vpow.pop %v1245
        %v1247 = vmul.f32 %v1240, 1.442695
        %v1248 = vpow.pop %v1247
        %v1249 = vld [vmem:[#allocation6] sm:$0xff]
        %v1250 = vld [vmem:[#allocation6 + $0x8] sm:$0xff]
        %v1251 = vld [vmem:[#allocation6 + $0x10] sm:$0xff]
        %v1252 = vld [vmem:[#allocation6 + $0x18] sm:$0xff]
        %v1253 = vmul.f32 %v1210, %v1249
        %v1254 = vmul.f32 %v1212, %v1250
        %v1255 = vmul.f32 %v1214, %v1251
        %v1256 = vmul.f32 %v1216, %v1252
        %v1257 = vsel %vm838, %v1242, 0.0
        %1258 = vadd.xlane.f32.xlu0 %v1257
        %v1259 = vpop.xlane.xlu0 %1258
        %v1260 = vsel %vm838, %v1244, 0.0
        %1261 = vadd.xlane.f32.xlu0 %v1260
        %v1262 = vpop.xlane.xlu0 %1261
        %v1263 = vsel %vm838, %v1246, 0.0
        %1264 = vadd.xlane.f32.xlu0 %v1263
        %v1265 = vpop.xlane.xlu0 %1264
        %v1266 = vsel %vm838, %v1248, 0.0
        %1267 = vadd.xlane.f32.xlu0 %v1266
        %v1268 = vpop.xlane.xlu0 %1267
        %v1269 = vadd.f32 %v1253, %v1259
        %v1270 = vadd.f32 %v1254, %v1262
        %v1271 = vadd.f32 %v1255, %v1265
        %v1272 = vadd.f32 %v1256, %v1268
        %vm1273 = vcmask 7168
        %1274 = vst.msk [vmem:[#allocation6] sm:$0xff] %vm1273, %v1269
        %1275 = vst.msk [vmem:[#allocation6 + $0x8] sm:$0xff] %vm1273, %v1270
        %1276 = vst.msk [vmem:[#allocation6 + $0x10] sm:$0xff] %vm1273, %v1271
        %1277 = vst.msk [vmem:[#allocation6 + $0x18] sm:$0xff] %vm1273, %v1272
        %v1278 = vld [vmem:[#allocation4] sm:$0xff]
        %v1279 = vld [vmem:[#allocation4 + $0x8] sm:$0xff]
        %v1280 = vld [vmem:[#allocation4 + $0x10] sm:$0xff]
        %v1281 = vld [vmem:[#allocation4 + $0x18] sm:$0xff]
        %v1283 = vsel %vm838, %v1242, 0
        %1285 = vmatprep.subr.mxu0 0.0
        %1286 = vmatpush1.msra.mxu0 %v1278
        %1287 = vmatprep.subr.mxu0 0.0
        %1288 = vmatpush1.msra.mxu0 0.0
        %1289 = vmatprep.subr.mxu0 0.0
        %1290 = vmatpush1.msra.mxu0 0.0
        %1291 = vmatprep.subr.mxu0 0.0
        %1292 = vmatpush1.msra.mxu0 0.0
        %1293 = vmatprep.subr.mxu0 0.0
        %1294 = vmatpush1.msra.mxu0 0.0
        %1295 = vmatprep.subr.mxu0 0.0
        %1296 = vmatpush1.msra.mxu0 0.0
        %1297 = vmatprep.subr.mxu0 0.0
        %1298 = vmatpush1.msra.mxu0 0.0
        %1299 = vmatprep.subr.mxu0 0.0
        %1300 = vmatpush1.msra.mxu0 0.0
        %1301 = vmatprep.subr.mxu0 0.0
        %1302 = vmatpush1.msra.mxu0 0.0
        %1303 = vmatprep.subr.mxu0 0.0
        %1304 = vmatpush1.msra.mxu0 0.0
        %1305 = vmatprep.subr.mxu0 0.0
        %1306 = vmatpush1.msra.mxu0 0.0
        %1307 = vmatprep.subr.mxu0 0.0
        %1308 = vmatpush1.msra.mxu0 0.0
        %1309 = vmatprep.subr.mxu0 0.0
        %1310 = vmatpush1.msra.mxu0 0.0
        %1311 = vmatprep.subr.mxu0 0.0
        %1312 = vmatpush1.msra.mxu0 0.0
        %1313 = vmatprep.subr.mxu0 0.0
        %1314 = vmatpush1.msra.mxu0 0.0
        %1315 = vmatprep.subr.mxu0 0.0
        %1316 = vmatpush1.msra.mxu0 0.0
        %1317 = vmatprep.subr.mxu0 0.0
        %1318 = vmatpush1.msra.mxu0 0.0
        %1319 = vmatprep.subr.mxu0 0.0
        %1320 = vmatpush1.msra.mxu0 0.0
        %1321 = vmatprep.subr.mxu0 0.0
        %1322 = vmatpush1.msra.mxu0 0.0
        %1323 = vmatprep.subr.mxu0 0.0
        %1324 = vmatpush1.msra.mxu0 0.0
        %1325 = vmatprep.subr.mxu0 0.0
        %1326 = vmatpush1.msra.mxu0 0.0
        %1327 = vmatprep.subr.mxu0 0.0
        %1328 = vmatpush1.msra.mxu0 0.0
        %1329 = vmatprep.subr.mxu0 0.0
        %1330 = vmatpush1.msra.mxu0 0.0
        %1331 = vmatprep.subr.mxu0 0.0
        %1332 = vmatpush1.msra.mxu0 0.0
        %1333 = vmatprep.subr.mxu0 0.0
        %1334 = vmatpush1.msra.mxu0 0.0
        %1335 = vmatprep.subr.mxu0 0.0
        %1336 = vmatpush1.msra.mxu0 0.0
        %1337 = vmatprep.subr.mxu0 0.0
        %1338 = vmatpush1.msra.mxu0 0.0
        %1339 = vmatprep.subr.mxu0 0.0
        %1340 = vmatpush1.msra.mxu0 0.0
        %1341 = vmatprep.subr.mxu0 0.0
        %1342 = vmatpush1.msra.mxu0 0.0
        %1343 = vmatprep.subr.mxu0 0.0
        %1344 = vmatpush1.msra.mxu0 0.0
        %1345 = vmatprep.subr.mxu0 0.0
        %1346 = vmatpush1.msra.mxu0 0.0
        %1347 = vmatprep.subr.mxu0 0.0
        %1348 = vmatpush1.msra.mxu0 0.0
        %1349 = vmatprep.mubr.f32.mxu0 0.0
        %1350 = vmatmul.mubr.f32.gmra.mrb[0].mxu0 %v1283
        %v1351 = vpop.f32.mrb[0].mxu0
        %v1352 = vadd.f32 0.0, %v1351
        %v1353 = vpop.f32.mrb[0].mxu0
        %1354 = vdwg.mxu0
        %v1356 = vsel %vm838, %v1244, 0
        %1358 = vmatprep.subr.mxu0 0.0
        %1359 = vmatpush1.msra.mxu0 %v1279
        %1360 = vmatprep.subr.mxu0 0.0
        %1361 = vmatpush1.msra.mxu0 0.0
        %1362 = vmatprep.subr.mxu0 0.0
        %1363 = vmatpush1.msra.mxu0 0.0
        %1364 = vmatprep.subr.mxu0 0.0
        %1365 = vmatpush1.msra.mxu0 0.0
        %1366 = vmatprep.subr.mxu0 0.0
        %1367 = vmatpush1.msra.mxu0 0.0
        %1368 = vmatprep.subr.mxu0 0.0
        %1369 = vmatpush1.msra.mxu0 0.0
        %1370 = vmatprep.subr.mxu0 0.0
        %1371 = vmatpush1.msra.mxu0 0.0
        %1372 = vmatprep.subr.mxu0 0.0
        %1373 = vmatpush1.msra.mxu0 0.0
        %1374 = vmatprep.subr.mxu0 0.0
        %1375 = vmatpush1.msra.mxu0 0.0
        %1376 = vmatprep.subr.mxu0 0.0
        %1377 = vmatpush1.msra.mxu0 0.0
        %1378 = vmatprep.subr.mxu0 0.0
        %1379 = vmatpush1.msra.mxu0 0.0
        %1380 = vmatprep.subr.mxu0 0.0
        %1381 = vmatpush1.msra.mxu0 0.0
        %1382 = vmatprep.subr.mxu0 0.0
        %1383 = vmatpush1.msra.mxu0 0.0
        %1384 = vmatprep.subr.mxu0 0.0
        %1385 = vmatpush1.msra.mxu0 0.0
        %1386 = vmatprep.subr.mxu0 0.0
        %1387 = vmatpush1.msra.mxu0 0.0
        %1388 = vmatprep.subr.mxu0 0.0
        %1389 = vmatpush1.msra.mxu0 0.0
        %1390 = vmatprep.subr.mxu0 0.0
        %1391 = vmatpush1.msra.mxu0 0.0
        %1392 = vmatprep.subr.mxu0 0.0
        %1393 = vmatpush1.msra.mxu0 0.0
        %1394 = vmatprep.subr.mxu0 0.0
        %1395 = vmatpush1.msra.mxu0 0.0
        %1396 = vmatprep.subr.mxu0 0.0
        %1397 = vmatpush1.msra.mxu0 0.0
        %1398 = vmatprep.subr.mxu0 0.0
        %1399 = vmatpush1.msra.mxu0 0.0
        %1400 = vmatprep.subr.mxu0 0.0
        %1401 = vmatpush1.msra.mxu0 0.0
        %1402 = vmatprep.subr.mxu0 0.0
        %1403 = vmatpush1.msra.mxu0 0.0
        %1404 = vmatprep.subr.mxu0 0.0
        %1405 = vmatpush1.msra.mxu0 0.0
        %1406 = vmatprep.subr.mxu0 0.0
        %1407 = vmatpush1.msra.mxu0 0.0
        %1408 = vmatprep.subr.mxu0 0.0
        %1409 = vmatpush1.msra.mxu0 0.0
        %1410 = vmatprep.subr.mxu0 0.0
        %1411 = vmatpush1.msra.mxu0 0.0
        %1412 = vmatprep.subr.mxu0 0.0
        %1413 = vmatpush1.msra.mxu0 0.0
        %1414 = vmatprep.subr.mxu0 0.0
        %1415 = vmatpush1.msra.mxu0 0.0
        %1416 = vmatprep.subr.mxu0 0.0
        %1417 = vmatpush1.msra.mxu0 0.0
        %1418 = vmatprep.subr.mxu0 0.0
        %1419 = vmatpush1.msra.mxu0 0.0
        %1420 = vmatprep.subr.mxu0 0.0
        %1421 = vmatpush1.msra.mxu0 0.0
        %1422 = vmatprep.mubr.f32.mxu0 0.0
        %1423 = vmatmul.mubr.f32.gmra.mrb[0].mxu0 %v1356
        %v1424 = vpop.f32.mrb[0].mxu0
        %v1425 = vadd.f32 0.0, %v1424
        %v1426 = vpop.f32.mrb[0].mxu0
        %1427 = vdwg.mxu0
        %v1429 = vsel %vm838, %v1246, 0
        %1431 = vmatprep.subr.mxu0 0.0
        %1432 = vmatpush1.msra.mxu0 %v1280
        %1433 = vmatprep.subr.mxu0 0.0
        %1434 = vmatpush1.msra.mxu0 0.0
        %1435 = vmatprep.subr.mxu0 0.0
        %1436 = vmatpush1.msra.mxu0 0.0
        %1437 = vmatprep.subr.mxu0 0.0
        %1438 = vmatpush1.msra.mxu0 0.0
        %1439 = vmatprep.subr.mxu0 0.0
        %1440 = vmatpush1.msra.mxu0 0.0
        %1441 = vmatprep.subr.mxu0 0.0
        %1442 = vmatpush1.msra.mxu0 0.0
        %1443 = vmatprep.subr.mxu0 0.0
        %1444 = vmatpush1.msra.mxu0 0.0
        %1445 = vmatprep.subr.mxu0 0.0
        %1446 = vmatpush1.msra.mxu0 0.0
        %1447 = vmatprep.subr.mxu0 0.0
        %1448 = vmatpush1.msra.mxu0 0.0
        %1449 = vmatprep.subr.mxu0 0.0
        %1450 = vmatpush1.msra.mxu0 0.0
        %1451 = vmatprep.subr.mxu0 0.0
        %1452 = vmatpush1.msra.mxu0 0.0
        %1453 = vmatprep.subr.mxu0 0.0
        %1454 = vmatpush1.msra.mxu0 0.0
        %1455 = vmatprep.subr.mxu0 0.0
        %1456 = vmatpush1.msra.mxu0 0.0
        %1457 = vmatprep.subr.mxu0 0.0
        %1458 = vmatpush1.msra.mxu0 0.0
        %1459 = vmatprep.subr.mxu0 0.0
        %1460 = vmatpush1.msra.mxu0 0.0
        %1461 = vmatprep.subr.mxu0 0.0
        %1462 = vmatpush1.msra.mxu0 0.0
        %1463 = vmatprep.subr.mxu0 0.0
        %1464 = vmatpush1.msra.mxu0 0.0
        %1465 = vmatprep.subr.mxu0 0.0
        %1466 = vmatpush1.msra.mxu0 0.0
        %1467 = vmatprep.subr.mxu0 0.0
        %1468 = vmatpush1.msra.mxu0 0.0
        %1469 = vmatprep.subr.mxu0 0.0
        %1470 = vmatpush1.msra.mxu0 0.0
        %1471 = vmatprep.subr.mxu0 0.0
        %1472 = vmatpush1.msra.mxu0 0.0
        %1473 = vmatprep.subr.mxu0 0.0
        %1474 = vmatpush1.msra.mxu0 0.0
        %1475 = vmatprep.subr.mxu0 0.0
        %1476 = vmatpush1.msra.mxu0 0.0
        %1477 = vmatprep.subr.mxu0 0.0
        %1478 = vmatpush1.msra.mxu0 0.0
        %1479 = vmatprep.subr.mxu0 0.0
        %1480 = vmatpush1.msra.mxu0 0.0
        %1481 = vmatprep.subr.mxu0 0.0
        %1482 = vmatpush1.msra.mxu0 0.0
        %1483 = vmatprep.subr.mxu0 0.0
        %1484 = vmatpush1.msra.mxu0 0.0
        %1485 = vmatprep.subr.mxu0 0.0
        %1486 = vmatpush1.msra.mxu0 0.0
        %1487 = vmatprep.subr.mxu0 0.0
        %1488 = vmatpush1.msra.mxu0 0.0
        %1489 = vmatprep.subr.mxu0 0.0
        %1490 = vmatpush1.msra.mxu0 0.0
        %1491 = vmatprep.subr.mxu0 0.0
        %1492 = vmatpush1.msra.mxu0 0.0
        %1493 = vmatprep.subr.mxu0 0.0
        %1494 = vmatpush1.msra.mxu0 0.0
        %1495 = vmatprep.mubr.f32.mxu0 0.0
        %1496 = vmatmul.mubr.f32.gmra.mrb[0].mxu0 %v1429
        %v1497 = vpop.f32.mrb[0].mxu0
        %v1498 = vadd.f32 0.0, %v1497
        %v1499 = vpop.f32.mrb[0].mxu0
        %1500 = vdwg.mxu0
        %v1502 = vsel %vm838, %v1248, 0
        %1504 = vmatprep.subr.mxu0 0.0
        %1505 = vmatpush1.msra.mxu0 %v1281
        %1506 = vmatprep.subr.mxu0 0.0
        %1507 = vmatpush1.msra.mxu0 0.0
        %1508 = vmatprep.subr.mxu0 0.0
        %1509 = vmatpush1.msra.mxu0 0.0
        %1510 = vmatprep.subr.mxu0 0.0
        %1511 = vmatpush1.msra.mxu0 0.0
        %1512 = vmatprep.subr.mxu0 0.0
        %1513 = vmatpush1.msra.mxu0 0.0
        %1514 = vmatprep.subr.mxu0 0.0
        %1515 = vmatpush1.msra.mxu0 0.0
        %1516 = vmatprep.subr.mxu0 0.0
        %1517 = vmatpush1.msra.mxu0 0.0
        %1518 = vmatprep.subr.mxu0 0.0
        %1519 = vmatpush1.msra.mxu0 0.0
        %1520 = vmatprep.subr.mxu0 0.0
        %1521 = vmatpush1.msra.mxu0 0.0
        %1522 = vmatprep.subr.mxu0 0.0
        %1523 = vmatpush1.msra.mxu0 0.0
        %1524 = vmatprep.subr.mxu0 0.0
        %1525 = vmatpush1.msra.mxu0 0.0
        %1526 = vmatprep.subr.mxu0 0.0
        %1527 = vmatpush1.msra.mxu0 0.0
        %1528 = vmatprep.subr.mxu0 0.0
        %1529 = vmatpush1.msra.mxu0 0.0
        %1530 = vmatprep.subr.mxu0 0.0
        %1531 = vmatpush1.msra.mxu0 0.0
        %1532 = vmatprep.subr.mxu0 0.0
        %1533 = vmatpush1.msra.mxu0 0.0
        %1534 = vmatprep.subr.mxu0 0.0
        %1535 = vmatpush1.msra.mxu0 0.0
        %1536 = vmatprep.subr.mxu0 0.0
        %1537 = vmatpush1.msra.mxu0 0.0
        %1538 = vmatprep.subr.mxu0 0.0
        %1539 = vmatpush1.msra.mxu0 0.0
        %1540 = vmatprep.subr.mxu0 0.0
        %1541 = vmatpush1.msra.mxu0 0.0
        %1542 = vmatprep.subr.mxu0 0.0
        %1543 = vmatpush1.msra.mxu0 0.0
        %1544 = vmatprep.subr.mxu0 0.0
        %1545 = vmatpush1.msra.mxu0 0.0
        %1546 = vmatprep.subr.mxu0 0.0
        %1547 = vmatpush1.msra.mxu0 0.0
        %1548 = vmatprep.subr.mxu0 0.0
        %1549 = vmatpush1.msra.mxu0 0.0
        %1550 = vmatprep.subr.mxu0 0.0
        %1551 = vmatpush1.msra.mxu0 0.0
        %1552 = vmatprep.subr.mxu0 0.0
        %1553 = vmatpush1.msra.mxu0 0.0
        %1554 = vmatprep.subr.mxu0 0.0
        %1555 = vmatpush1.msra.mxu0 0.0
        %1556 = vmatprep.subr.mxu0 0.0
        %1557 = vmatpush1.msra.mxu0 0.0
        %1558 = vmatprep.subr.mxu0 0.0
        %1559 = vmatpush1.msra.mxu0 0.0
        %1560 = vmatprep.subr.mxu0 0.0
        %1561 = vmatpush1.msra.mxu0 0.0
        %1562 = vmatprep.subr.mxu0 0.0
        %1563 = vmatpush1.msra.mxu0 0.0
        %1564 = vmatprep.subr.mxu0 0.0
        %1565 = vmatpush1.msra.mxu0 0.0
        %1566 = vmatprep.subr.mxu0 0.0
        %1567 = vmatpush1.msra.mxu0 0.0
        %1568 = vmatprep.mubr.f32.mxu0 0.0
        %1569 = vmatmul.mubr.f32.gmra.mrb[0].mxu0 %v1502
        %v1570 = vpop.f32.mrb[0].mxu0
        %v1571 = vadd.f32 0.0, %v1570
        %v1572 = vpop.f32.mrb[0].mxu0
        %1573 = vdwg.mxu0
        %v1574 = vld [vmem:[#allocation7] sm:$0xff]
        %v1575 = vld [vmem:[#allocation7 + $0x8] sm:$0xff]
        %v1576 = vld [vmem:[#allocation7 + $0x10] sm:$0xff]
        %v1577 = vld [vmem:[#allocation7 + $0x18] sm:$0xff]
        %1579 = vset.pattern.permute.xlu0 0
        %1580 = vperm.xlu0 %1579, %v1210
        %v1581 = vpop.permute.xlu0 %1580
        %1584 = vset.pattern.permute.xlu0 0
        %1585 = vperm.xlu0 %1584, %v1212
        %v1586 = vpop.permute.xlu0 %1585
        %1589 = vset.pattern.permute.xlu0 0
        %1590 = vperm.xlu0 %1589, %v1214
        %v1591 = vpop.permute.xlu0 %1590
        %1594 = vset.pattern.permute.xlu0 0
        %1595 = vperm.xlu0 %1594, %v1216
        %v1596 = vpop.permute.xlu0 %1595
        %v1598 = vmul.f32 %v1581, %v1574
        %v1599 = vmul.f32 %v1586, %v1575
        %v1600 = vmul.f32 %v1591, %v1576
        %v1601 = vmul.f32 %v1596, %v1577
        %v1602 = vadd.f32 %v1598, %v1352
        %v1603 = vadd.f32 %v1599, %v1425
        %v1604 = vadd.f32 %v1600, %v1498
        %v1605 = vadd.f32 %v1601, %v1571
        %1606 = vst.msk [vmem:[#allocation7] sm:$0xff] %vm838, %v1602
        %1607 = vst.msk [vmem:[#allocation7 + $0x8] sm:$0xff] %vm838, %v1603
        %1608 = vst.msk [vmem:[#allocation7 + $0x10] sm:$0xff] %vm838, %v1604
        %1609 = vst.msk [vmem:[#allocation7 + $0x18] sm:$0xff] %vm838, %v1605
        %1610 = vst.msk [vmem:[#allocation5] sm:$0xff] %vm1273, %v1201
        %1611 = vst.msk [vmem:[#allocation5 + $0x8] sm:$0xff] %vm1273, %v1202
        %1612 = vst.msk [vmem:[#allocation5 + $0x10] sm:$0xff] %vm1273, %v1203
        %1613 = vst.msk [vmem:[#allocation5 + $0x18] sm:$0xff] %vm1273, %v1204
        %p1614 = scmp.eq.s32.totalorder %s41, 1
        // Predicated region
        $region105: #{tpu_custom_call.1} parent=59 // pred_check
          %p1615 = pneg %p1614
        $region106: #{tpu_custom_call.1} parent=59 // pred_check_branch
          %1617 = sbr.rel (%p1615) target = $region108
        $region107: #{tpu_custom_call.1} parent=59 // pred_region
          %v1618 = vld [vmem:[#allocation6] sm:$0xff]
          %v1619 = vld [vmem:[#allocation6 + $0x8] sm:$0xff]
          %v1620 = vld [vmem:[#allocation6 + $0x10] sm:$0xff]
          %v1621 = vld [vmem:[#allocation6 + $0x18] sm:$0xff]
          %v1622 = vrcp.pop %v1618
          %v1623 = vrcp.pop %v1619
          %v1624 = vrcp.pop %v1620
          %v1625 = vrcp.pop %v1621
          %v1626 = vld [vmem:[#allocation7] sm:$0xff]
          %v1627 = vld [vmem:[#allocation7 + $0x8] sm:$0xff]
          %v1628 = vld [vmem:[#allocation7 + $0x10] sm:$0xff]
          %v1629 = vld [vmem:[#allocation7 + $0x18] sm:$0xff]
          %1631 = vset.pattern.permute.xlu0 0
          %1632 = vperm.xlu0 %1631, %v1622
          %v1633 = vpop.permute.xlu0 %1632
          %1636 = vset.pattern.permute.xlu0 0
          %1637 = vperm.xlu0 %1636, %v1623
          %v1638 = vpop.permute.xlu0 %1637
          %1641 = vset.pattern.permute.xlu0 0
          %1642 = vperm.xlu0 %1641, %v1624
          %v1643 = vpop.permute.xlu0 %1642
          %1646 = vset.pattern.permute.xlu0 0
          %1647 = vperm.xlu0 %1646, %v1625
          %v1648 = vpop.permute.xlu0 %1647
          %v1650 = vmul.f32 %v1626, %v1633
          %v1651 = vmul.f32 %v1627, %v1638
          %v1652 = vmul.f32 %v1628, %v1643
          %v1653 = vmul.f32 %v1629, %v1648
          %v1654 = vld [vmem:[#allocation22] sm:$0xff]
          %v1655 = vld [vmem:[#allocation22 + $0x8] sm:$0xff]
          %v1656 = vld [vmem:[#allocation22 + $0x10] sm:$0xff]
          %v1657 = vld [vmem:[#allocation22 + $0x18] sm:$0xff]
          %v1659 = vsel %vm838, %v1650, 0
          %1661 = vmatprep.subr.mxu0 0.0
          %1662 = vmatpush1.msra.mxu0 %v1654
          %1663 = vmatprep.subr.mxu0 0.0
          %1664 = vmatpush1.msra.mxu0 0.0
          %1665 = vmatprep.subr.mxu0 0.0
          %1666 = vmatpush1.msra.mxu0 0.0
          %1667 = vmatprep.subr.mxu0 0.0
          %1668 = vmatpush1.msra.mxu0 0.0
          %1669 = vmatprep.subr.mxu0 0.0
          %1670 = vmatpush1.msra.mxu0 0.0
          %1671 = vmatprep.subr.mxu0 0.0
          %1672 = vmatpush1.msra.mxu0 0.0
          %1673 = vmatprep.subr.mxu0 0.0
          %1674 = vmatpush1.msra.mxu0 0.0
          %1675 = vmatprep.subr.mxu0 0.0
          %1676 = vmatpush1.msra.mxu0 0.0
          %1677 = vmatprep.subr.mxu0 0.0
          %1678 = vmatpush1.msra.mxu0 0.0
          %1679 = vmatprep.subr.mxu0 0.0
          %1680 = vmatpush1.msra.mxu0 0.0
          %1681 = vmatprep.subr.mxu0 0.0
          %1682 = vmatpush1.msra.mxu0 0.0
          %1683 = vmatprep.subr.mxu0 0.0
          %1684 = vmatpush1.msra.mxu0 0.0
          %1685 = vmatprep.subr.mxu0 0.0
          %1686 = vmatpush1.msra.mxu0 0.0
          %1687 = vmatprep.subr.mxu0 0.0
          %1688 = vmatpush1.msra.mxu0 0.0
          %1689 = vmatprep.subr.mxu0 0.0
          %1690 = vmatpush1.msra.mxu0 0.0
          %1691 = vmatprep.subr.mxu0 0.0
          %1692 = vmatpush1.msra.mxu0 0.0
          %1693 = vmatprep.subr.mxu0 0.0
          %1694 = vmatpush1.msra.mxu0 0.0
          %1695 = vmatprep.subr.mxu0 0.0
          %1696 = vmatpush1.msra.mxu0 0.0
          %1697 = vmatprep.subr.mxu0 0.0
          %1698 = vmatpush1.msra.mxu0 0.0
          %1699 = vmatprep.subr.mxu0 0.0
          %1700 = vmatpush1.msra.mxu0 0.0
          %1701 = vmatprep.subr.mxu0 0.0
          %1702 = vmatpush1.msra.mxu0 0.0
          %1703 = vmatprep.subr.mxu0 0.0
          %1704 = vmatpush1.msra.mxu0 0.0
          %1705 = vmatprep.subr.mxu0 0.0
          %1706 = vmatpush1.msra.mxu0 0.0
          %1707 = vmatprep.subr.mxu0 0.0
          %1708 = vmatpush1.msra.mxu0 0.0
          %1709 = vmatprep.subr.mxu0 0.0
          %1710 = vmatpush1.msra.mxu0 0.0
          %1711 = vmatprep.subr.mxu0 0.0
          %1712 = vmatpush1.msra.mxu0 0.0
          %1713 = vmatprep.subr.mxu0 0.0
          %1714 = vmatpush1.msra.mxu0 0.0
          %1715 = vmatprep.subr.mxu0 0.0
          %1716 = vmatpush1.msra.mxu0 0.0
          %1717 = vmatprep.subr.mxu0 0.0
          %1718 = vmatpush1.msra.mxu0 0.0
          %1719 = vmatprep.subr.mxu0 0.0
          %1720 = vmatpush1.msra.mxu0 0.0
          %1721 = vmatprep.subr.mxu0 0.0
          %1722 = vmatpush1.msra.mxu0 0.0
          %1723 = vmatprep.subr.mxu0 0.0
          %1724 = vmatpush1.msra.mxu0 0.0
          %1725 = vmatprep.mubr.f32.mxu0 0.0
          %1726 = vmatmul.mubr.f32.gmra.mrb[0].mxu0 %v1659
          %v1727 = vpop.f32.mrb[0].mxu0
          %v1728 = vadd.f32 0.0, %v1727
          %v1729 = vpop.f32.mrb[0].mxu0
          %1730 = vdwg.mxu0
          %v1732 = vsel %vm838, %v1651, 0
          %1734 = vmatprep.subr.mxu0 0.0
          %1735 = vmatpush1.msra.mxu0 %v1655
          %1736 = vmatprep.subr.mxu0 0.0
          %1737 = vmatpush1.msra.mxu0 0.0
          %1738 = vmatprep.subr.mxu0 0.0
          %1739 = vmatpush1.msra.mxu0 0.0
          %1740 = vmatprep.subr.mxu0 0.0
          %1741 = vmatpush1.msra.mxu0 0.0
          %1742 = vmatprep.subr.mxu0 0.0
          %1743 = vmatpush1.msra.mxu0 0.0
          %1744 = vmatprep.subr.mxu0 0.0
          %1745 = vmatpush1.msra.mxu0 0.0
          %1746 = vmatprep.subr.mxu0 0.0
          %1747 = vmatpush1.msra.mxu0 0.0
          %1748 = vmatprep.subr.mxu0 0.0
          %1749 = vmatpush1.msra.mxu0 0.0
          %1750 = vmatprep.subr.mxu0 0.0
          %1751 = vmatpush1.msra.mxu0 0.0
          %1752 = vmatprep.subr.mxu0 0.0
          %1753 = vmatpush1.msra.mxu0 0.0
          %1754 = vmatprep.subr.mxu0 0.0
          %1755 = vmatpush1.msra.mxu0 0.0
          %1756 = vmatprep.subr.mxu0 0.0
          %1757 = vmatpush1.msra.mxu0 0.0
          %1758 = vmatprep.subr.mxu0 0.0
          %1759 = vmatpush1.msra.mxu0 0.0
          %1760 = vmatprep.subr.mxu0 0.0
          %1761 = vmatpush1.msra.mxu0 0.0
          %1762 = vmatprep.subr.mxu0 0.0
          %1763 = vmatpush1.msra.mxu0 0.0
          %1764 = vmatprep.subr.mxu0 0.0
          %1765 = vmatpush1.msra.mxu0 0.0
          %1766 = vmatprep.subr.mxu0 0.0
          %1767 = vmatpush1.msra.mxu0 0.0
          %1768 = vmatprep.subr.mxu0 0.0
          %1769 = vmatpush1.msra.mxu0 0.0
          %1770 = vmatprep.subr.mxu0 0.0
          %1771 = vmatpush1.msra.mxu0 0.0
          %1772 = vmatprep.subr.mxu0 0.0
          %1773 = vmatpush1.msra.mxu0 0.0
          %1774 = vmatprep.subr.mxu0 0.0
          %1775 = vmatpush1.msra.mxu0 0.0
          %1776 = vmatprep.subr.mxu0 0.0
          %1777 = vmatpush1.msra.mxu0 0.0
          %1778 = vmatprep.subr.mxu0 0.0
          %1779 = vmatpush1.msra.mxu0 0.0
          %1780 = vmatprep.subr.mxu0 0.0
          %1781 = vmatpush1.msra.mxu0 0.0
          %1782 = vmatprep.subr.mxu0 0.0
          %1783 = vmatpush1.msra.mxu0 0.0
          %1784 = vmatprep.subr.mxu0 0.0
          %1785 = vmatpush1.msra.mxu0 0.0
          %1786 = vmatprep.subr.mxu0 0.0
          %1787 = vmatpush1.msra.mxu0 0.0
          %1788 = vmatprep.subr.mxu0 0.0
          %1789 = vmatpush1.msra.mxu0 0.0
          %1790 = vmatprep.subr.mxu0 0.0
          %1791 = vmatpush1.msra.mxu0 0.0
          %1792 = vmatprep.subr.mxu0 0.0
          %1793 = vmatpush1.msra.mxu0 0.0
          %1794 = vmatprep.subr.mxu0 0.0
          %1795 = vmatpush1.msra.mxu0 0.0
          %1796 = vmatprep.subr.mxu0 0.0
          %1797 = vmatpush1.msra.mxu0 0.0
          %1798 = vmatprep.mubr.f32.mxu0 0.0
          %1799 = vmatmul.mubr.f32.gmra.mrb[0].mxu0 %v1732
          %v1800 = vpop.f32.mrb[0].mxu0
          %v1801 = vadd.f32 0.0, %v1800
          %v1802 = vpop.f32.mrb[0].mxu0
          %1803 = vdwg.mxu0
          %v1805 = vsel %vm838, %v1652, 0
          %1807 = vmatprep.subr.mxu0 0.0
          %1808 = vmatpush1.msra.mxu0 %v1656
          %1809 = vmatprep.subr.mxu0 0.0
          %1810 = vmatpush1.msra.mxu0 0.0
          %1811 = vmatprep.subr.mxu0 0.0
          %1812 = vmatpush1.msra.mxu0 0.0
          %1813 = vmatprep.subr.mxu0 0.0
          %1814 = vmatpush1.msra.mxu0 0.0
          %1815 = vmatprep.subr.mxu0 0.0
          %1816 = vmatpush1.msra.mxu0 0.0
          %1817 = vmatprep.subr.mxu0 0.0
          %1818 = vmatpush1.msra.mxu0 0.0
          %1819 = vmatprep.subr.mxu0 0.0
          %1820 = vmatpush1.msra.mxu0 0.0
          %1821 = vmatprep.subr.mxu0 0.0
          %1822 = vmatpush1.msra.mxu0 0.0
          %1823 = vmatprep.subr.mxu0 0.0
          %1824 = vmatpush1.msra.mxu0 0.0
          %1825 = vmatprep.subr.mxu0 0.0
          %1826 = vmatpush1.msra.mxu0 0.0
          %1827 = vmatprep.subr.mxu0 0.0
          %1828 = vmatpush1.msra.mxu0 0.0
          %1829 = vmatprep.subr.mxu0 0.0
          %1830 = vmatpush1.msra.mxu0 0.0
          %1831 = vmatprep.subr.mxu0 0.0
          %1832 = vmatpush1.msra.mxu0 0.0
          %1833 = vmatprep.subr.mxu0 0.0
          %1834 = vmatpush1.msra.mxu0 0.0
          %1835 = vmatprep.subr.mxu0 0.0
          %1836 = vmatpush1.msra.mxu0 0.0
          %1837 = vmatprep.subr.mxu0 0.0
          %1838 = vmatpush1.msra.mxu0 0.0
          %1839 = vmatprep.subr.mxu0 0.0
          %1840 = vmatpush1.msra.mxu0 0.0
          %1841 = vmatprep.subr.mxu0 0.0
          %1842 = vmatpush1.msra.mxu0 0.0
          %1843 = vmatprep.subr.mxu0 0.0
          %1844 = vmatpush1.msra.mxu0 0.0
          %1845 = vmatprep.subr.mxu0 0.0
          %1846 = vmatpush1.msra.mxu0 0.0
          %1847 = vmatprep.subr.mxu0 0.0
          %1848 = vmatpush1.msra.mxu0 0.0
          %1849 = vmatprep.subr.mxu0 0.0
          %1850 = vmatpush1.msra.mxu0 0.0
          %1851 = vmatprep.subr.mxu0 0.0
          %1852 = vmatpush1.msra.mxu0 0.0
          %1853 = vmatprep.subr.mxu0 0.0
          %1854 = vmatpush1.msra.mxu0 0.0
          %1855 = vmatprep.subr.mxu0 0.0
          %1856 = vmatpush1.msra.mxu0 0.0
          %1857 = vmatprep.subr.mxu0 0.0
          %1858 = vmatpush1.msra.mxu0 0.0
          %1859 = vmatprep.subr.mxu0 0.0
          %1860 = vmatpush1.msra.mxu0 0.0
          %1861 = vmatprep.subr.mxu0 0.0
          %1862 = vmatpush1.msra.mxu0 0.0
          %1863 = vmatprep.subr.mxu0 0.0
          %1864 = vmatpush1.msra.mxu0 0.0
          %1865 = vmatprep.subr.mxu0 0.0
          %1866 = vmatpush1.msra.mxu0 0.0
          %1867 = vmatprep.subr.mxu0 0.0
          %1868 = vmatpush1.msra.mxu0 0.0
          %1869 = vmatprep.subr.mxu0 0.0
          %1870 = vmatpush1.msra.mxu0 0.0
          %1871 = vmatprep.mubr.f32.mxu0 0.0
          %1872 = vmatmul.mubr.f32.gmra.mrb[0].mxu0 %v1805
          %v1873 = vpop.f32.mrb[0].mxu0
          %v1874 = vadd.f32 0.0, %v1873
          %v1875 = vpop.f32.mrb[0].mxu0
          %1876 = vdwg.mxu0
          %v1878 = vsel %vm838, %v1653, 0
          %1880 = vmatprep.subr.mxu0 0.0
          %1881 = vmatpush1.msra.mxu0 %v1657
          %1882 = vmatprep.subr.mxu0 0.0
          %1883 = vmatpush1.msra.mxu0 0.0
          %1884 = vmatprep.subr.mxu0 0.0
          %1885 = vmatpush1.msra.mxu0 0.0
          %1886 = vmatprep.subr.mxu0 0.0
          %1887 = vmatpush1.msra.mxu0 0.0
          %1888 = vmatprep.subr.mxu0 0.0
          %1889 = vmatpush1.msra.mxu0 0.0
          %1890 = vmatprep.subr.mxu0 0.0
          %1891 = vmatpush1.msra.mxu0 0.0
          %1892 = vmatprep.subr.mxu0 0.0
          %1893 = vmatpush1.msra.mxu0 0.0
          %1894 = vmatprep.subr.mxu0 0.0
          %1895 = vmatpush1.msra.mxu0 0.0
          %1896 = vmatprep.subr.mxu0 0.0
          %1897 = vmatpush1.msra.mxu0 0.0
          %1898 = vmatprep.subr.mxu0 0.0
          %1899 = vmatpush1.msra.mxu0 0.0
          %1900 = vmatprep.subr.mxu0 0.0
          %1901 = vmatpush1.msra.mxu0 0.0
          %1902 = vmatprep.subr.mxu0 0.0
          %1903 = vmatpush1.msra.mxu0 0.0
          %1904 = vmatprep.subr.mxu0 0.0
          %1905 = vmatpush1.msra.mxu0 0.0
          %1906 = vmatprep.subr.mxu0 0.0
          %1907 = vmatpush1.msra.mxu0 0.0
          %1908 = vmatprep.subr.mxu0 0.0
          %1909 = vmatpush1.msra.mxu0 0.0
          %1910 = vmatprep.subr.mxu0 0.0
          %1911 = vmatpush1.msra.mxu0 0.0
          %1912 = vmatprep.subr.mxu0 0.0
          %1913 = vmatpush1.msra.mxu0 0.0
          %1914 = vmatprep.subr.mxu0 0.0
          %1915 = vmatpush1.msra.mxu0 0.0
          %1916 = vmatprep.subr.mxu0 0.0
          %1917 = vmatpush1.msra.mxu0 0.0
          %1918 = vmatprep.subr.mxu0 0.0
          %1919 = vmatpush1.msra.mxu0 0.0
          %1920 = vmatprep.subr.mxu0 0.0
          %1921 = vmatpush1.msra.mxu0 0.0
          %1922 = vmatprep.subr.mxu0 0.0
          %1923 = vmatpush1.msra.mxu0 0.0
          %1924 = vmatprep.subr.mxu0 0.0
          %1925 = vmatpush1.msra.mxu0 0.0
          %1926 = vmatprep.subr.mxu0 0.0
          %1927 = vmatpush1.msra.mxu0 0.0
          %1928 = vmatprep.subr.mxu0 0.0
          %1929 = vmatpush1.msra.mxu0 0.0
          %1930 = vmatprep.subr.mxu0 0.0
          %1931 = vmatpush1.msra.mxu0 0.0
          %1932 = vmatprep.subr.mxu0 0.0
          %1933 = vmatpush1.msra.mxu0 0.0
          %1934 = vmatprep.subr.mxu0 0.0
          %1935 = vmatpush1.msra.mxu0 0.0
          %1936 = vmatprep.subr.mxu0 0.0
          %1937 = vmatpush1.msra.mxu0 0.0
          %1938 = vmatprep.subr.mxu0 0.0
          %1939 = vmatpush1.msra.mxu0 0.0
          %1940 = vmatprep.subr.mxu0 0.0
          %1941 = vmatpush1.msra.mxu0 0.0
          %1942 = vmatprep.subr.mxu0 0.0
          %1943 = vmatpush1.msra.mxu0 0.0
          %1944 = vmatprep.mubr.f32.mxu0 0.0
          %1945 = vmatmul.mubr.f32.gmra.mrb[0].mxu0 %v1878
          %v1946 = vpop.f32.mrb[0].mxu0
          %v1947 = vadd.f32 0.0, %v1946
          %v1948 = vpop.f32.mrb[0].mxu0
          %1949 = vdwg.mxu0
          %v1950 = vadd.f32 %v1728, %v1801
          %v1951 = vadd.f32 %v1950, %v1874
          %v1952 = vadd.f32 %v1951, %v1947
          %v1953 = vld [vmem:[#allocation23] sm:$0x1]
          %v1955 = vlaneseq
          %v1956 = vshrl.u32 %v1955, 7
          %v1957 = vsub.s32 0, %v1956
          %v1958 = vrot.slane %v1953, %v1957
          %v1960 = vadd.f32 %v1952, %v1958
          %1961 = vst.msk [vmem:[%s548] sm:$0xff] %vm683, %v1960
        $region108: #{tpu_custom_call.1} parent=59 // pred_fallthru
          _
        %s1962 = sand.u32 %s287, 1
        %s1963 = scalar_lea.sflag [#allocation10], %s1962
        %s1964 = sand.u32 %s287, 1
        %s1965 = smul.addr %s1964, 8
        %s1966 = scalar_lea.vmem [#allocation25], %s1965
        // Predicated region
        $region109: #{tpu_custom_call.1} parent=59 // pred_check
          %p1967 = pneg %p297
        $region110: #{tpu_custom_call.1} parent=59 // pred_check_branch
          %1969 = sbr.rel (%p1967) target = $region112
        $region111: #{tpu_custom_call.1} parent=59 // pred_region
          %s1971 = ssub.s32 128, 128
          %1972 = vsyncadd %s1963, %s1971
          %s1973 = smul.addr %s39, 2
          %s1974 = sadd.s32 %s40, %s1973
          %s1975 = smul.addr %s1974, 128
          %s1976 = scalar_lea.hbm %s10, %s1975
          %s1978 = sshll.u32 %s1966, 4
          %s1979 = int_to_ptr.vmem [resolvable:$true] %s1978
          %1981 = dma.vmem_to_hbm [thread:$0]  %s1979, 128, %s1976, %s1963
        $region112: #{tpu_custom_call.1} parent=59 // pred_fallthru
          _
      $region60: #{tpu_custom_call.1} parent=5 // pred_fallthru
        _
      %p1982 = scmp.le.s32.totalorder 2, %s29
      // Predicated region
      $region113: #{tpu_custom_call.1} parent=5 // pred_check
        %p1983 = pneg %p1982
      $region114: #{tpu_custom_call.1} parent=5 // pred_check_branch
        %1985 = sbr.rel (%p1983) target = $region116
      $region115: #{tpu_custom_call.1} parent=5 // pred_region
        %s1986 = ssub.s32 %s29, 2
        // Predicated region
        $region117: #{tpu_custom_call.1} parent=115 // pred_check
          %p1987 = pneg %p303
        $region118: #{tpu_custom_call.1} parent=115 // pred_check_branch
          %1989 = sbr.rel (%p1987) target = $region120
        $region119: #{tpu_custom_call.1} parent=115 // pred_region
          %s1990 = sand.u32 %s288, 1
          %s1991 = scalar_lea.sflag [#allocation10], %s1990
          %s1992 = sand.u32 %s288, 1
          %s1993 = smul.addr %s1992, 8
          %s1994 = scalar_lea.vmem [#allocation25], %s1993
          %1995 = dma.done %s1991, 128
        $region120: #{tpu_custom_call.1} parent=115 // pred_fallthru
          _
      $region116: #{tpu_custom_call.1} parent=5 // pred_fallthru
        _
    $region6: #{tpu_custom_call.1} parent=1 // loop_footer
      %s33 = sadd.s32 1, %s29
    $region7: #{tpu_custom_call.1} parent=1 // loop_footer_branch
      %28 = sbr.rel target = $region3
    $region8: #{tpu_custom_call.1} parent=1 // loop_exit
      _
    %1996 = vsyncpa [#allocation9], 1
    %s1997 = scalar_lea.sflag [#allocation9], 1
    %1998 = vsyncpa %s1997, 1
    %1999 = vsyncpa [#allocation12], 1
    %s2000 = scalar_lea.sflag [#allocation12], 1
    %2001 = vsyncpa %s2000, 1
    %2002 = vsyncpa [#allocation15], 1
    %2003 = vsyncpa [#allocation18], 1
    %2004 = vsyncpa [#allocation21], 1
    %2005 = vsyncpa [#allocation24], 1
    %2006 = vsyncpa [#allocation10], 1
    %s2007 = scalar_lea.sflag [#allocation10], 1
    %2008 = vsyncpa %s2007, 1

</llo_original>
